<compile_context>
chip_gen: v7x
topology: tpu7x:2x2x1
jax: 0.10.0
libtpu: 0.0.40
codegen_flags: <defaults>
</compile_context>

<pallas_src>
import functools
import math

import jax
import jax.numpy as jnp
from jax import lax
from jax.experimental import pallas as pl
from jax.experimental.pallas import tpu as pltpu


def _round_up(a, m):
    return (a + m - 1) // m * m


def _cdiv(a, b):
    return -(-a // b)


def tent_fused_kernel(x_ref, w_ref, b_ref, out_ref, wnew_ref, bnew_ref,
                      z_acc, gram_acc, x_save, *,
                      n_valid, k_valid, lr, steps, nd):
    """Fused Tent adapt step(s) for a linear classifier (transposed W layout).

    x_ref   : [Bp, tile_d]          streamed D tile of the (padded) input
    w_ref   : [nd, Kp, tile_d]      resident W^T (read from HBM exactly once)
    b_ref   : [1, Kp]               bias
    out_ref : [Bp, Kp]              eval-mode logits after `steps` updates
    wnew_ref: [nd, Kp, tile_d]      updated W^T (written to HBM exactly once)
    bnew_ref: [1, Kp]               updated bias (HBM-aliased to b)
    """
    d = pl.program_id(0)
    last = pl.num_programs(0) - 1

    @pl.when(d == 0)
    def _init():
        z_acc[...] = jnp.zeros_like(z_acc)
        gram_acc[...] = jnp.zeros_like(gram_acc)

    xt = x_ref[...]                                     # [Bp, tile_d]
    wt = w_ref[d]                                       # [Kp, tile_d]
    # z += x_d @ W_d  (contract the D tile); gram += x_d @ x_d^T
    z_acc[...] += lax.dot_general(xt, wt, (((1,), (1,)), ((), ())),
                                  preferred_element_type=jnp.float32)
    gram_acc[...] += lax.dot_general(xt, xt, (((1,), (1,)), ((), ())),
                                     preferred_element_type=jnp.float32)
    x_save[d] = xt                                      # keep x for the W update

    @pl.when(d == last)
    def _finalize():
        bp, kp = z_acc.shape
        bvec = b_ref[...]                               # [1, Kp]
        gram = gram_acc[...]                            # [Bp, Bp]
        row_mask = lax.broadcasted_iota(jnp.int32, (bp, kp), 0) < n_valid
        col_mask = lax.broadcasted_iota(jnp.int32, (bp, kp), 1) < k_valid
        neg_big = jnp.float32(-1e30)                    # finite sentinel (no 0*inf)
        scale = jnp.float32(lr / n_valid)               # 1/B folded into lr

        z = z_acc[...] + bvec                           # logits, step 0
        s_sum = jnp.zeros_like(z)                       # lr * sum_t dL/dz_t

        # `steps` is static -> fully unrolled at trace time.
        for _ in range(steps):
            zc = jnp.where(col_mask, z, neg_big)        # mask padded classes
            m = jnp.max(zc, axis=1, keepdims=True)
            e = jnp.exp(zc - m)
            denom = jnp.sum(e, axis=1, keepdims=True)
            p = e * pl.reciprocal(denom)                # exact (tolerance-bound)
            logp = (zc - m) - jnp.log(denom)
            ent = -jnp.sum(jnp.where(col_mask, p * logp, 0.0),
                           axis=1, keepdims=True)
            gz = -(p * (logp + ent)) * scale            # lr * dL/dz
            gz = jnp.where(row_mask & col_mask, gz, 0.0)
            gb = jnp.sum(gz, axis=0, keepdims=True)     # lr * dL/db
            # x @ W_{t+1} + b_{t+1}  ==  z_t - G @ gz - gb   (Gram identity)
            z = z - jnp.dot(gram, gz, preferred_element_type=jnp.float32) - gb
            s_sum = s_sum + gz

        out_ref[...] = z                                # eval-mode logits
        bnew_ref[...] = bvec - jnp.sum(s_sum, axis=0, keepdims=True)

        def _update_tile(n, carry):
            # W^T_new[n] = W^T[n] - S^T @ x[n]
            gw = lax.dot_general(s_sum, x_save[n], (((0,), (0,)), ((), ())),
                                 preferred_element_type=jnp.float32)
            wnew_ref[n] = w_ref[n] - gw
            return carry

        lax.fori_loop(0, nd, _update_tile, 0)


@functools.lru_cache(maxsize=None)
def _build_tent_forward(Bp, Kp, tile_d, nd, n_valid, k_valid, lr, steps,
                        vmem_limit):
    call = pl.pallas_call(
        functools.partial(tent_fused_kernel, n_valid=n_valid, k_valid=k_valid,
                          lr=lr, steps=steps, nd=nd),
        grid=(nd,),
        in_specs=[
            pl.BlockSpec((Bp, tile_d), lambda d: (0, d)),          # x: streamed once
            pl.BlockSpec((nd, Kp, tile_d), lambda d: (0, 0, 0)),   # W^T: resident (read once)
            pl.BlockSpec((1, Kp), lambda d: (0, 0)),               # b
        ],
        out_specs=(
            pl.BlockSpec((Bp, Kp), lambda d: (0, 0)),              # eval logits
            pl.BlockSpec((nd, Kp, tile_d), lambda d: (0, 0, 0)),   # W^T_new: resident (write once)
            pl.BlockSpec((1, Kp), lambda d: (0, 0)),               # b_new
        ),
        out_shape=(
            jax.ShapeDtypeStruct((Bp, Kp), jnp.float32),
            jax.ShapeDtypeStruct((nd, Kp, tile_d), jnp.float32),
            jax.ShapeDtypeStruct((1, Kp), jnp.float32),
        ),
        scratch_shapes=[
            pltpu.VMEM((Bp, Kp), jnp.float32),           # z accumulator
            pltpu.VMEM((Bp, Bp), jnp.float32),           # Gram accumulator
            pltpu.VMEM((nd, Bp, tile_d), jnp.float32),   # x resident for W update
        ],
        input_output_aliases={2: 2},                     # b -> b_new in place
        compiler_params=pltpu.CompilerParams(
            dimension_semantics=("arbitrary",),          # D is a reduction axis
            vmem_limit_bytes=int(vmem_limit)),
    )
    return jax.jit(call)


class TentPallas:
    """Mirrors Tent(model, optimizer, steps, episodic, act='softmax') where the
    wrapped model is a linear classifier z = flatten(x) @ W + b and the
    optimizer is plain constant-lr SGD (the fused in-kernel multi-step
    recurrence is only valid for that optimizer: no momentum / weight decay /
    lr schedule)."""

    def __init__(self, w, b, lr=0.01, steps=1, episodic=False):
        assert steps > 0, "tent requires >= 1 step(s) to forward and update"
        self.steps = int(steps)
        self.episodic = episodic
        self.lr = float(lr)

        D, K = w.shape
        self.D, self.K = D, K
        # Class dim lives on sublanes (pad to 8), feature dim on lanes: for
        # small K this cuts W HBM traffic / VMEM by up to 16x vs 128-lane pad.
        self.Kp = max(8, _round_up(K, 8))

        # Generation-aware VMEM budget (v7x 64 MiB physical, v5e/v6e 128 MiB).
        try:
            cap = int(pltpu.get_tpu_info().vmem_capacity_bytes)
        except Exception:
            cap = 64 * 1024 * 1024
        self.vmem_limit = (cap * 3) // 4

        # Large D tiles (amortize the ~0.35us per-grid-step overhead) while
        # keeping the D padding small.
        d_aligned = _round_up(D, 128)
        target_tile = 8192
        self.nd = max(1, _cdiv(d_aligned, target_tile))
        self.tile_d = _round_up(_cdiv(d_aligned, self.nd), 128)
        self.Dp = self.nd * self.tile_d

        # Parameters stored transposed and D-blocked:
        #   w3[n, k, t] = W[n*tile_d + t, k]
        w_t = jnp.zeros((self.Kp, self.Dp), jnp.float32)
        w_t = w_t.at[:K, :D].set(jnp.asarray(w, jnp.float32).T)
        w3 = w_t.reshape(self.Kp, self.nd, self.tile_d).transpose(1, 0, 2)
        b_pad = jnp.zeros((1, self.Kp), jnp.float32)
        b_pad = b_pad.at[:, :K].set(jnp.asarray(b, jnp.float32).reshape(1, K))

        self.w3, self.b_pad = w3, b_pad
        self.w3_0, self.b_pad_0 = w3, b_pad      # saved state for reset()

    def reset(self):
        self.w3, self.b_pad = self.w3_0, self.b_pad_0

    @property
    def w(self):
        wt = self.w3.transpose(1, 0, 2).reshape(self.Kp, self.Dp)
        return wt.T[:self.D, :self.K]

    @property
    def b(self):
        return self.b_pad[:, :self.K]

    def forward(self, x, reset=False):
        if self.episodic or reset:
            self.reset()
        B = x.shape[0]
        D = math.prod(x.shape[1:])
        assert D == self.D
        Bp = max(8, _round_up(B, 8))             # sublane-align the batch

        x_flat = jnp.asarray(x, jnp.float32).reshape(B, D)
        if Bp != B or self.Dp != D:
            # Pad only when needed; aligned callers skip the extra x copy.
            x_flat = jnp.pad(x_flat, ((0, Bp - B), (0, self.Dp - D)))

        # Fused resident-W kernel: W read once + written once, x read once.
        est = 4 * (2 * self.Kp * self.Dp          # resident W^T in + W^T_new out
                   + Bp * self.Dp                 # x kept in VMEM for the update
                   + 4 * Bp * self.tile_d         # double-buffered streamed x tile
                   + Bp * Bp + 4 * Bp * self.Kp)  # gram / z / logits
        # TODO(synk): add a two-pass streaming fallback (W tiled through VMEM)
        # when the resident-W working set exceeds the VMEM budget.
        assert est <= self.vmem_limit, \
            "model too large for the fused resident-W Tent kernel"

        fwd = _build_tent_forward(Bp, self.Kp, self.tile_d, self.nd,
                                  B, self.K, self.lr, self.steps,
                                  self.vmem_limit)
        out, self.w3, self.b_pad = fwd(x_flat, self.w3, self.b_pad)
        return out[:B, :self.K]


def _reference_forward(x, w, b, lr, steps):
    """Pure-JAX reference of the same Tent semantics (for validation)."""
    B = x.shape[0]
    xf = x.reshape(B, -1).astype(jnp.float32)
    w = w.astype(jnp.float32)
    b = b.astype(jnp.float32)
    out = None
    for _ in range(steps):
        z = xf @ w + b
        p = jax.nn.softmax(z, axis=1)
        logp = jax.nn.log_softmax(z, axis=1)
        ent = -jnp.sum(p * logp, axis=1, keepdims=True)
        gz = -(p * (logp + ent)) / B
        gw = xf.T @ gz
        gb = jnp.sum(gz, axis=0, keepdims=True)
        w = w - lr * gw
        b = b - lr * gb
        out = xf @ w + b
    return out, w, b


if __name__ == "__main__":
    key = jax.random.PRNGKey(0)
    kx, kw, kb = jax.random.split(key, 3)

    # small shapes: batch=2, channels=4, spatial=16x16, num_classes=8
    B, C, H, W = 2, 4, 16, 16
    K = 8
    D = C * H * W

    x = jax.random.normal(kx, (B, C, H, W), dtype=jnp.float32)
    w0 = jax.random.normal(kw, (D, K), dtype=jnp.float32) * 0.02
    b0 = jax.random.normal(kb, (1, K), dtype=jnp.float32) * 0.01

    # steps=1 (default Tent config)
    tent = TentPallas(w0, b0, lr=0.01, steps=1, episodic=False)
    out = jax.block_until_ready(tent.forward(x))
    ref_out, ref_w, ref_b = _reference_forward(x, w0, b0, lr=0.01, steps=1)
    assert out.shape == (B, K)
    assert jnp.allclose(out, ref_out, atol=1e-4, rtol=1e-4)
    assert jnp.allclose(tent.w, ref_w, atol=1e-5, rtol=1e-5)
    assert jnp.allclose(tent.b, ref_b, atol=1e-5, rtol=1e-5)

    # steps=2 validates the fused in-kernel multi-step recurrence
    tent2 = TentPallas(w0, b0, lr=0.01, steps=2, episodic=False)
    out2 = jax.block_until_ready(tent2.forward(x))
    ref_out2, ref_w2, _ = _reference_forward(x, w0, b0, lr=0.01, steps=2)
    assert jnp.allclose(out2, ref_out2, atol=1e-4, rtol=1e-4)
    assert jnp.allclose(tent2.w, ref_w2, atol=1e-5, rtol=1e-5)

    print("KERNEL_OK")
</pallas_src>

<mosaic_0001>
module attributes {stable_mosaic.version = 11 : i64} {
  func.func @tent_fused_kernel(%arg0: i32, %arg1: memref<8x1024xf32, #tpu.memory_space<vmem>>, %arg2: memref<1x8x1024xf32, #tpu.memory_space<vmem>>, %arg3: memref<1x8xf32, #tpu.memory_space<vmem>>, %arg4: memref<8x8xf32, #tpu.memory_space<vmem>>, %arg5: memref<1x8x1024xf32, #tpu.memory_space<vmem>>, %arg6: memref<1x8xf32, #tpu.memory_space<vmem>>, %arg7: memref<8x8xf32, #tpu.memory_space<vmem>>, %arg8: memref<8x8xf32, #tpu.memory_space<vmem>>, %arg9: memref<1x8x1024xf32, #tpu.memory_space<vmem>>) attributes {dimension_semantics = [#tpu.dimension_semantics<arbitrary>], iteration_bounds = array<i64: 1>, scalar_prefetch = 0 : i64, scratch_operands = 3 : i64, tpu.core_type = #tpu.core_type<tc>, window_params = [{transform_indices = @transform_0, window_bounds = array<i64: 8, 1024>}, {pipeline_mode = #tpu.pipeline_mode<synchronous>, transform_indices = @transform_1, window_bounds = array<i64: 1, 8, 1024>}, {pipeline_mode = #tpu.pipeline_mode<synchronous>, transform_indices = @transform_2, window_bounds = array<i64: 1, 8>}, {pipeline_mode = #tpu.pipeline_mode<synchronous>, transform_indices = @transform_3, window_bounds = array<i64: 8, 8>}, {pipeline_mode = #tpu.pipeline_mode<synchronous>, transform_indices = @transform_4, window_bounds = array<i64: 1, 8, 1024>}, {pipeline_mode = #tpu.pipeline_mode<synchronous>, transform_indices = @transform_5, window_bounds = array<i64: 1, 8>}]} {
    %c0_i32 = arith.constant 0 : i32
    %0 = arith.cmpi eq, %arg0, %c0_i32 : i32
    %1 = arith.extui %0 : i1 to i32
    %c0_i32_0 = arith.constant 0 : i32
    %2 = arith.cmpi ne, %1, %c0_i32_0 : i32
    scf.if %2 {
      %cst_17 = arith.constant 0.000000e+00 : f32
      %22 = vector.broadcast %cst_17 : f32 to vector<8x8xf32>
      %c0_18 = arith.constant 0 : index
      %c0_19 = arith.constant 0 : index
      %23 = vector.load %arg7[%c0_18, %c0_19] : memref<8x8xf32, #tpu.memory_space<vmem>>, vector<8x8xf32>
      tpu.vector_store %arg7[%c0_18, %c0_19], %22 {strides = array<i32>} : memref<8x8xf32, #tpu.memory_space<vmem>>, vector<8x8xf32>,
      %cst_20 = arith.constant 0.000000e+00 : f32
      %24 = vector.broadcast %cst_20 : f32 to vector<8x8xf32>
      %c0_21 = arith.constant 0 : index
      %c0_22 = arith.constant 0 : index
      %25 = vector.load %arg8[%c0_21, %c0_22] : memref<8x8xf32, #tpu.memory_space<vmem>>, vector<8x8xf32>
      tpu.vector_store %arg8[%c0_21, %c0_22], %24 {strides = array<i32>} : memref<8x8xf32, #tpu.memory_space<vmem>>, vector<8x8xf32>,
    } else {
    }
    %c0 = arith.constant 0 : index
    %c0_1 = arith.constant 0 : index
    %3 = vector.load %arg1[%c0, %c0_1] : memref<8x1024xf32, #tpu.memory_space<vmem>>, vector<8x1024xf32>
    %4 = arith.index_cast %arg0 : i32 to index
    %c0_2 = arith.constant 0 : index
    %c0_3 = arith.constant 0 : index
    %5 = vector.load %arg2[%4, %c0_2, %c0_3] : memref<1x8x1024xf32, #tpu.memory_space<vmem>>, vector<1x8x1024xf32>
    %6 = vector.shape_cast %5 : vector<1x8x1024xf32> to vector<8x1024xf32>
    %c0_4 = arith.constant 0 : index
    %c0_5 = arith.constant 0 : index
    %7 = vector.load %arg7[%c0_4, %c0_5] : memref<8x8xf32, #tpu.memory_space<vmem>>, vector<8x8xf32>
    %cst = arith.constant dense<0.000000e+00> : vector<8x8xf32>
    %8 = tpu.matmul %3, %6, %cst {dimension_numbers = #tpu.dot_dimension_numbers<[1], [1], [0], [0], [0, 0, 1, 0], [], []>} : vector<8x1024xf32>, vector<8x1024xf32>, vector<8x8xf32> -> vector<8x8xf32>
    %9 = arith.addf %7, %8 : vector<8x8xf32>
    %c0_6 = arith.constant 0 : index
    %c0_7 = arith.constant 0 : index
    %10 = vector.load %arg7[%c0_6, %c0_7] : memref<8x8xf32, #tpu.memory_space<vmem>>, vector<8x8xf32>
    tpu.vector_store %arg7[%c0_6, %c0_7], %9 {strides = array<i32>} : memref<8x8xf32, #tpu.memory_space<vmem>>, vector<8x8xf32>,
    %c0_8 = arith.constant 0 : index
    %c0_9 = arith.constant 0 : index
    %11 = vector.load %arg8[%c0_8, %c0_9] : memref<8x8xf32, #tpu.memory_space<vmem>>, vector<8x8xf32>
    %cst_10 = arith.constant dense<0.000000e+00> : vector<8x8xf32>
    %12 = tpu.matmul %3, %3, %cst_10 {dimension_numbers = #tpu.dot_dimension_numbers<[1], [1], [0], [0], [0, 0, 1, 0], [], []>} : vector<8x1024xf32>, vector<8x1024xf32>, vector<8x8xf32> -> vector<8x8xf32>
    %13 = arith.addf %11, %12 : vector<8x8xf32>
    %c0_11 = arith.constant 0 : index
    %c0_12 = arith.constant 0 : index
    %14 = vector.load %arg8[%c0_11, %c0_12] : memref<8x8xf32, #tpu.memory_space<vmem>>, vector<8x8xf32>
    tpu.vector_store %arg8[%c0_11, %c0_12], %13 {strides = array<i32>} : memref<8x8xf32, #tpu.memory_space<vmem>>, vector<8x8xf32>,
    %15 = arith.index_cast %arg0 : i32 to index
    %c0_13 = arith.constant 0 : index
    %c0_14 = arith.constant 0 : index
    %16 = vector.load %arg9[%15, %c0_13, %c0_14] : memref<1x8x1024xf32, #tpu.memory_space<vmem>>, vector<1x8x1024xf32>
    %17 = vector.shape_cast %16 : vector<1x8x1024xf32> to vector<8x1024xf32>
    %18 = vector.shape_cast %3 : vector<8x1024xf32> to vector<1x8x1024xf32>
    tpu.vector_store %arg9[%15, %c0_13, %c0_14], %18 {strides = array<i32>} : memref<1x8x1024xf32, #tpu.memory_space<vmem>>, vector<1x8x1024xf32>,
    %c0_i32_15 = arith.constant 0 : i32
    %19 = arith.cmpi eq, %arg0, %c0_i32_15 : i32
    %20 = arith.extui %19 : i1 to i32
    %c0_i32_16 = arith.constant 0 : i32
    %21 = arith.cmpi ne, %20, %c0_i32_16 : i32
    scf.if %21 {
      %c0_17 = arith.constant 0 : index
      %c0_18 = arith.constant 0 : index
      %22 = vector.load %arg3[%c0_17, %c0_18] : memref<1x8xf32, #tpu.memory_space<vmem>>, vector<1x8xf32>
      %c0_19 = arith.constant 0 : index
      %c0_20 = arith.constant 0 : index
      %23 = vector.load %arg8[%c0_19, %c0_20] : memref<8x8xf32, #tpu.memory_space<vmem>>, vector<8x8xf32>
      %24 = tpu.iota {dimensions = array<i32: 0>} : vector<8x8xi32>
      %c2_i32 = arith.constant 2 : i32
      %25 = vector.broadcast %c2_i32 : i32 to vector<8x8xi32>
      %26 = arith.cmpi slt, %24, %25 : vector<8x8xi32>
      %27 = tpu.iota {dimensions = array<i32: 1>} : vector<8x8xi32>
      %c8_i32 = arith.constant 8 : i32
      %28 = vector.broadcast %c8_i32 : i32 to vector<8x8xi32>
      %29 = arith.cmpi slt, %27, %28 : vector<8x8xi32>
      %c0_21 = arith.constant 0 : index
      %c0_22 = arith.constant 0 : index
      %30 = vector.load %arg7[%c0_21, %c0_22] : memref<8x8xf32, #tpu.memory_space<vmem>>, vector<8x8xf32>
      %31 = vector.broadcast %22 : vector<1x8xf32> to vector<8x8xf32>
      %32 = arith.addf %30, %31 : vector<8x8xf32>
      %cst_23 = arith.constant 0.000000e+00 : f32
      %33 = vector.broadcast %cst_23 : f32 to vector<8x8xf32>
      %cst_24 = arith.constant -1.000000e+30 : f32
      %34 = vector.broadcast %cst_24 : f32 to vector<8x8xf32>
      %35 = arith.select %29, %32, %34 : vector<8x8xi1>, vector<8x8xf32>
      %cst_25 = arith.constant dense<0xFF800000> : vector<8xf32>
      %36 = vector.multi_reduction <maximumf>, %35, %cst_25 [1] : vector<8x8xf32> to vector<8xf32>
      %37 = vector.shape_cast %36 : vector<8xf32> to vector<8x1xf32>
      %38 = vector.broadcast %37 : vector<8x1xf32> to vector<8x8xf32>
      %39 = arith.subf %35, %38 : vector<8x8xf32>
      %40 = math.exp %39 : vector<8x8xf32>
      %cst_26 = arith.constant dense<0.000000e+00> : vector<8xf32>
      %41 = vector.multi_reduction <add>, %40, %cst_26 [1] : vector<8x8xf32> to vector<8xf32>
      %42 = vector.shape_cast %41 : vector<8xf32> to vector<8x1xf32>
      %43 = tpu.reciprocal %42 : vector<8x1xf32> -> vector<8x1xf32>
      %44 = vector.broadcast %43 : vector<8x1xf32> to vector<8x8xf32>
      %45 = arith.mulf %40, %44 : vector<8x8xf32>
      %46 = vector.broadcast %37 : vector<8x1xf32> to vector<8x8xf32>
      %47 = arith.subf %35, %46 : vector<8x8xf32>
      %48 = math.log %42 : vector<8x1xf32>
      %49 = vector.broadcast %48 : vector<8x1xf32> to vector<8x8xf32>
      %50 = arith.subf %47, %49 : vector<8x8xf32>
      %51 = arith.mulf %45, %50 : vector<8x8xf32>
      %cst_27 = arith.constant 0.000000e+00 : f32
      %52 = vector.broadcast %cst_27 : f32 to vector<8x8xf32>
      %53 = arith.select %29, %51, %52 : vector<8x8xi1>, vector<8x8xf32>
      %cst_28 = arith.constant dense<0.000000e+00> : vector<8xf32>
      %54 = vector.multi_reduction <add>, %53, %cst_28 [1] : vector<8x8xf32> to vector<8xf32>
      %55 = vector.shape_cast %54 : vector<8xf32> to vector<8x1xf32>
      %cst_29 = arith.constant 0.000000e+00 : f32
      %56 = vector.broadcast %cst_29 : f32 to vector<8x1xf32>
      %57 = arith.subf %56, %55 : vector<8x1xf32>
      %58 = vector.broadcast %57 : vector<8x1xf32> to vector<8x8xf32>
      %59 = arith.addf %50, %58 : vector<8x8xf32>
      %60 = arith.mulf %45, %59 : vector<8x8xf32>
      %cst_30 = arith.constant 0.000000e+00 : f32
      %61 = vector.broadcast %cst_30 : f32 to vector<8x8xf32>
      %62 = arith.subf %61, %60 : vector<8x8xf32>
      %cst_31 = arith.constant 5.000000e-03 : f32
      %63 = vector.broadcast %cst_31 : f32 to vector<8x8xf32>
      %64 = arith.mulf %62, %63 : vector<8x8xf32>
      %65 = arith.andi %26, %29 : vector<8x8xi1>
      %cst_32 = arith.constant 0.000000e+00 : f32
      %66 = vector.broadcast %cst_32 : f32 to vector<8x8xf32>
      %67 = arith.select %65, %64, %66 : vector<8x8xi1>, vector<8x8xf32>
      %cst_33 = arith.constant dense<0.000000e+00> : vector<8xf32>
      %68 = vector.multi_reduction <add>, %67, %cst_33 [0] : vector<8x8xf32> to vector<8xf32>
      %69 = vector.shape_cast %68 : vector<8xf32> to vector<1x8xf32>
      %cst_34 = arith.constant dense<0.000000e+00> : vector<8x8xf32>
      %70 = tpu.matmul %23, %67, %cst_34 {dimension_numbers = #tpu.dot_dimension_numbers<[1], [0], [0], [1], [0, 0, 1, 1], [], []>} : vector<8x8xf32>, vector<8x8xf32>, vector<8x8xf32> -> vector<8x8xf32>
      %71 = arith.subf %32, %70 : vector<8x8xf32>
      %72 = vector.broadcast %69 : vector<1x8xf32> to vector<8x8xf32>
      %73 = arith.subf %71, %72 : vector<8x8xf32>
      %74 = arith.addf %33, %67 : vector<8x8xf32>
      %c0_35 = arith.constant 0 : index
      %c0_36 = arith.constant 0 : index
      %75 = vector.load %arg4[%c0_35, %c0_36] : memref<8x8xf32, #tpu.memory_space<vmem>>, vector<8x8xf32>
      tpu.vector_store %arg4[%c0_35, %c0_36], %73 {strides = array<i32>} : memref<8x8xf32, #tpu.memory_space<vmem>>, vector<8x8xf32>,
      %cst_37 = arith.constant dense<0.000000e+00> : vector<8xf32>
      %76 = vector.multi_reduction <add>, %74, %cst_37 [0] : vector<8x8xf32> to vector<8xf32>
      %77 = vector.shape_cast %76 : vector<8xf32> to vector<1x8xf32>
      %78 = arith.subf %22, %77 : vector<1x8xf32>
      %c0_38 = arith.constant 0 : index
      %c0_39 = arith.constant 0 : index
      %79 = vector.load %arg6[%c0_38, %c0_39] : memref<1x8xf32, #tpu.memory_space<vmem>>, vector<1x8xf32>
      tpu.vector_store %arg6[%c0_38, %c0_39], %78 {strides = array<i32>} : memref<1x8xf32, #tpu.memory_space<vmem>>, vector<1x8xf32>,
      %c0_i32_40 = arith.constant 0 : i32
      %80 = arith.index_cast %c0_i32_40 : i32 to index
      %c0_41 = arith.constant 0 : index
      %c0_42 = arith.constant 0 : index
      %81 = vector.load %arg9[%80, %c0_41, %c0_42] : memref<1x8x1024xf32, #tpu.memory_space<vmem>>, vector<1x8x1024xf32>
      %82 = vector.shape_cast %81 : vector<1x8x1024xf32> to vector<8x1024xf32>
      %cst_43 = arith.constant dense<0.000000e+00> : vector<8x1024xf32>
      %83 = tpu.matmul %74, %82, %cst_43 {dimension_numbers = #tpu.dot_dimension_numbers<[0], [0], [1], [1], [0, 1, 1, 1], [], []>} : vector<8x8xf32>, vector<8x1024xf32>, vector<8x1024xf32> -> vector<8x1024xf32>
      %84 = arith.index_cast %c0_i32_40 : i32 to index
      %c0_44 = arith.constant 0 : index
      %c0_45 = arith.constant 0 : index
      %85 = vector.load %arg2[%84, %c0_44, %c0_45] : memref<1x8x1024xf32, #tpu.memory_space<vmem>>, vector<1x8x1024xf32>
      %86 = vector.shape_cast %85 : vector<1x8x1024xf32> to vector<8x1024xf32>
      %87 = arith.subf %86, %83 : vector<8x1024xf32>
      %88 = arith.index_cast %c0_i32_40 : i32 to index
      %c0_46 = arith.constant 0 : index
      %c0_47 = arith.constant 0 : index
      %89 = vector.load %arg5[%88, %c0_46, %c0_47] : memref<1x8x1024xf32, #tpu.memory_space<vmem>>, vector<1x8x1024xf32>
      %90 = vector.shape_cast %89 : vector<1x8x1024xf32> to vector<8x1024xf32>
      %91 = vector.shape_cast %87 : vector<8x1024xf32> to vector<1x8x1024xf32>
      tpu.vector_store %arg5[%88, %c0_46, %c0_47], %91 {strides = array<i32>} : memref<1x8x1024xf32, #tpu.memory_space<vmem>>, vector<1x8x1024xf32>,
      %c1_i32 = arith.constant 1 : i32
    } else {
    }
    return
  }
  func.func @transform_0(%arg0: i32) -> (i32, i32) {
    %c0_i32 = arith.constant 0 : i32
    %c0_i32_0 = arith.constant 0 : i32
    return %c0_i32, %arg0 : i32, i32
  }
  func.func @transform_1(%arg0: i32) -> (i32, i32, i32) {
    %c0_i32 = arith.constant 0 : i32
    %c0_i32_0 = arith.constant 0 : i32
    %c0_i32_1 = arith.constant 0 : i32
    %c0_i32_2 = arith.constant 0 : i32
    return %c0_i32, %c0_i32_0, %c0_i32_1 : i32, i32, i32
  }
  func.func @transform_2(%arg0: i32) -> (i32, i32) {
    %c0_i32 = arith.constant 0 : i32
    %c0_i32_0 = arith.constant 0 : i32
    %c0_i32_1 = arith.constant 0 : i32
    return %c0_i32, %c0_i32_0 : i32, i32
  }
  func.func @transform_3(%arg0: i32) -> (i32, i32) {
    %c0_i32 = arith.constant 0 : i32
    %c0_i32_0 = arith.constant 0 : i32
    %c0_i32_1 = arith.constant 0 : i32
    return %c0_i32, %c0_i32_0 : i32, i32
  }
  func.func @transform_4(%arg0: i32) -> (i32, i32, i32) {
    %c0_i32 = arith.constant 0 : i32
    %c0_i32_0 = arith.constant 0 : i32
    %c0_i32_1 = arith.constant 0 : i32
    %c0_i32_2 = arith.constant 0 : i32
    return %c0_i32, %c0_i32_0, %c0_i32_1 : i32, i32, i32
  }
  func.func @transform_5(%arg0: i32) -> (i32, i32) {
    %c0_i32 = arith.constant 0 : i32
    %c0_i32_0 = arith.constant 0 : i32
    %c0_i32_1 = arith.constant 0 : i32
    return %c0_i32, %c0_i32_0 : i32, i32
  }
}

</mosaic_0001>

<llo_original>
// kernel: tpu_custom_call.1
$region0: #{tpu_custom_call.1}
  #allocation0 [shape = 'u32[]', space=smem, size = 0x4, offset = 0x4, fixed_abs, tag = 'smem constant byte address 0x4 - core index']
  #allocation1 [shape = 'u32[144,128]{1,0:T(1,128)}', space=vmem, size = 0x12000, scoped, tag = 'internal scratch']
  #allocation2 [shape = 'f32[8,8]{1,0:T(8,128)}', space=vmem, size = 0x1000, scoped, tag = 'scratch operand']
  #allocation3 [shape = 'f32[8,8]{1,0:T(8,128)}', space=vmem, size = 0x1000, scoped, tag = 'scratch operand']
  #allocation4 [shape = 'f32[1,8,1024]{2,1,0:T(8,128)}', space=vmem, size = 0x8000, scoped, tag = 'scratch operand']
  %s0 = inlined_call_operand.hbm [shape: f32[8,1024], index: 0, kind: input, shape index: {}]
  %s1 = inlined_call_operand.hbm [shape: f32[1,8,1024], index: 1, kind: input, shape index: {}]
  %s2 = inlined_call_operand.hbm [shape: f32[1,8], index: 2, kind: input, shape index: {}, may-alias: {2,5}]
  %s3 = inlined_call_operand.hbm [shape: f32[8,8], index: 3, kind: output, shape index: {0}]
  %s4 = inlined_call_operand.hbm [shape: f32[1,8,1024], index: 4, kind: output, shape index: {1}]
  %s5 = inlined_call_operand.hbm [shape: f32[1,8], index: 5, kind: output, shape index: {2}, may-alias: {2,5}]
  %6 = xla_tuple %s3, %s4, %s5
  %s7 = sld [smem:[#allocation0]]
  $region58: #{tpu_custom_call.1} parent=0
    _
  %s9 = ssub.s32 1, %s7
  %s10 = scalar_select 0, %s9, %s7
  $region1: #{tpu_custom_call.1} parent=0
    #allocation5 [shape = 'u8[32768]{0}', space=vmem, size = 0x8000, scoped, tag = 'input window, operand 0, single buffered']
    #allocation6 [shape = 's32[1]{0}', space=sflag, size = 0x4, scoped, tag = 'scoped memory for tpu_custom_call.1']
    #allocation7 [shape = 's32[1]{0}', space=sflag, size = 0x4, scoped, tag = 'scoped memory for tpu_custom_call.1']
    #allocation8 [shape = 'u8[32768]{0}', space=vmem, size = 0x8000, scoped, tag = 'input window, operand 1, single buffered']
    #allocation9 [shape = 's32[1]{0}', space=sflag, size = 0x4, scoped, tag = 'scoped memory for tpu_custom_call.1']
    #allocation10 [shape = 'u8[512]{0}', space=vmem, size = 0x400, scoped, tag = 'input window, operand 2, single buffered']
    #allocation11 [shape = 'u8[4096]{0}', space=vmem, size = 0x1000, scoped, tag = 'output window, operand 0, single buffered']
    #allocation12 [shape = 'u8[32768]{0}', space=vmem, size = 0x8000, scoped, tag = 'output window, operand 1, single buffered']
    #allocation13 [shape = 's32[1]{0}', space=sflag, size = 0x4, scoped, tag = 'scoped memory for tpu_custom_call.1']
    #allocation14 [shape = 'u8[512]{0}', space=vmem, size = 0x400, scoped, tag = 'output window, operand 2, single buffered']
    %11 = vsyncpa [#allocation6], 0
    %12 = vsyncpa [#allocation9], 0
    %13 = vsyncpa [#allocation7], 0
    %14 = vsyncpa [#allocation13], 0
    // Predicated region
    $region2: #{tpu_custom_call.1} parent=1 // pred_check
      _
    $region3: #{tpu_custom_call.1} parent=1 // pred_check_branch
      %16 = sbr.rel (0) target = $region5
    $region4: #{tpu_custom_call.1} parent=1 // pred_region
      %s18 = ssub.s32 1024, 1024
      %19 = vsyncadd [#allocation6], %s18
      %s21 = sshll.u32 [#allocation5], 4
      %s22 = int_to_ptr.vmem [resolvable:$true] %s21
      %24 = dma.hbm_to_vmem [thread:$0]  %s0, 1024, %s22, [#allocation6]
    $region5: #{tpu_custom_call.1} parent=1 // pred_fallthru
      _
    // Predicated region
    $region6: #{tpu_custom_call.1} parent=1 // pred_check
      _
    $region7: #{tpu_custom_call.1} parent=1 // pred_check_branch
      %26 = sbr.rel (0) target = $region9
    $region8: #{tpu_custom_call.1} parent=1 // pred_region
      %s28 = ssub.s32 1024, 1024
      %29 = vsyncadd [#allocation9], %s28
      %s31 = sshll.u32 [#allocation8], 4
      %s32 = int_to_ptr.vmem [resolvable:$true] %s31
      %34 = dma.hbm_to_vmem [thread:$0]  %s1, 1024, %s32, [#allocation9]
    $region9: #{tpu_custom_call.1} parent=1 // pred_fallthru
      _
    // Predicated region
    $region10: #{tpu_custom_call.1} parent=1 // pred_check
      _
    $region11: #{tpu_custom_call.1} parent=1 // pred_check_branch
      %36 = sbr.rel (0) target = $region13
    $region12: #{tpu_custom_call.1} parent=1 // pred_region
      %s38 = ssub.s32 16, 16
      %39 = vsyncadd [#allocation9], %s38
      %s41 = sshll.u32 [#allocation10], 4
      %s42 = int_to_ptr.vmem [resolvable:$true] %s41
      %44 = dma.hbm_to_vmem [thread:$0]  %s2, 16, %s42, [#allocation9]
    $region13: #{tpu_custom_call.1} parent=1 // pred_fallthru
      _
    // Predicated region
    $region14: #{tpu_custom_call.1} parent=1 // pred_check
      _
    $region15: #{tpu_custom_call.1} parent=1 // pred_check_branch
      %46 = sbr.rel (0) target = $region17
    $region16: #{tpu_custom_call.1} parent=1 // pred_region
      %47 = dma.done [#allocation6], 1024
    $region17: #{tpu_custom_call.1} parent=1 // pred_fallthru
      _
    // Predicated region
    $region18: #{tpu_custom_call.1} parent=1 // pred_check
      _
    $region19: #{tpu_custom_call.1} parent=1 // pred_check_branch
      %49 = sbr.rel (0) target = $region21
    $region20: #{tpu_custom_call.1} parent=1 // pred_region
      %50 = dma.done [#allocation9], 1024
    $region21: #{tpu_custom_call.1} parent=1 // pred_fallthru
      _
    // Predicated region
    $region22: #{tpu_custom_call.1} parent=1 // pred_check
      _
    $region23: #{tpu_custom_call.1} parent=1 // pred_check_branch
      %52 = sbr.rel (0) target = $region25
    $region24: #{tpu_custom_call.1} parent=1 // pred_region
      %53 = dma.done [#allocation9], 16
    $region25: #{tpu_custom_call.1} parent=1 // pred_fallthru
      _
    %p54 = scmp.eq.s32.totalorder 0, 0
    // Predicated region
    $region26: #{tpu_custom_call.1} parent=1 // pred_check
      %p55 = pneg %p54
    $region27: #{tpu_custom_call.1} parent=1 // pred_check_branch
      %57 = sbr.rel (%p55) target = $region29
    $region28: #{tpu_custom_call.1} parent=1 // pred_region
      %vm58 = vcmask 64512
      %59 = vst.msk [vmem:[#allocation2] sm:$0xff] %vm58, 0.0
      %60 = vst.msk [vmem:[#allocation3] sm:$0xff] %vm58, 0.0
    $region29: #{tpu_custom_call.1} parent=1 // pred_fallthru
      _
    %v61 = vld [vmem:[#allocation5] sm:$0xff]
    %v62 = vld [vmem:[#allocation5 + $0x8] sm:$0xff]
    %v63 = vld [vmem:[#allocation5 + $0x10] sm:$0xff]
    %v64 = vld [vmem:[#allocation5 + $0x18] sm:$0xff]
    %v65 = vld [vmem:[#allocation5 + $0x20] sm:$0xff]
    %v66 = vld [vmem:[#allocation5 + $0x28] sm:$0xff]
    %v67 = vld [vmem:[#allocation5 + $0x30] sm:$0xff]
    %v68 = vld [vmem:[#allocation5 + $0x38] sm:$0xff]
    %s69 = smul.u32 0, 8
    %s70 = smul.addr %s69, 8
    %s71 = scalar_lea.vmem [#allocation8], %s70
    %v72 = vld [vmem:[%s71] sm:$0xff]
    %v73 = vld [vmem:[%s71 + $0x8] sm:$0xff]
    %v74 = vld [vmem:[%s71 + $0x10] sm:$0xff]
    %v75 = vld [vmem:[%s71 + $0x18] sm:$0xff]
    %v76 = vld [vmem:[%s71 + $0x20] sm:$0xff]
    %v77 = vld [vmem:[%s71 + $0x28] sm:$0xff]
    %v78 = vld [vmem:[%s71 + $0x30] sm:$0xff]
    %v79 = vld [vmem:[%s71 + $0x38] sm:$0xff]
    %v80 = vld [vmem:[#allocation2] sm:$0xff]
    %81 = vmatprep.subr.mxu0 %v73
    %82 = vmatpush1.xpose.msra.mxu0 %v72
    %83 = vmatprep.subr.mxu0 0.0
    %84 = vmatpush1.xpose.msra.mxu0 0.0
    %85 = vmatprep.subr.mxu0 0.0
    %86 = vmatpush1.xpose.msra.mxu0 0.0
    %87 = vmatprep.subr.mxu0 0.0
    %88 = vmatpush1.xpose.msra.mxu0 0.0
    %89 = vmatprep.subr.mxu0 0.0
    %90 = vmatpush1.xpose.msra.mxu0 0.0
    %91 = vmatprep.subr.mxu0 0.0
    %92 = vmatpush1.xpose.msra.mxu0 0.0
    %93 = vmatprep.subr.mxu0 0.0
    %94 = vmatpush1.xpose.msra.mxu0 0.0
    %95 = vmatprep.subr.mxu0 0.0
    %96 = vmatpush1.xpose.msra.mxu0 0.0
    %97 = vmatprep.subr.mxu0 0.0
    %98 = vmatpush1.xpose.msra.mxu0 0.0
    %99 = vmatprep.subr.mxu0 0.0
    %100 = vmatpush1.xpose.msra.mxu0 0.0
    %101 = vmatprep.subr.mxu0 0.0
    %102 = vmatpush1.xpose.msra.mxu0 0.0
    %103 = vmatprep.subr.mxu0 0.0
    %104 = vmatpush1.xpose.msra.mxu0 0.0
    %105 = vmatprep.subr.mxu0 0.0
    %106 = vmatpush1.xpose.msra.mxu0 0.0
    %107 = vmatprep.subr.mxu0 0.0
    %108 = vmatpush1.xpose.msra.mxu0 0.0
    %109 = vmatprep.subr.mxu0 0.0
    %110 = vmatpush1.xpose.msra.mxu0 0.0
    %111 = vmatprep.subr.mxu0 0.0
    %112 = vmatpush1.xpose.msra.mxu0 0.0
    %113 = vmatprep.subr.mxu0 0.0
    %114 = vmatpush1.xpose.msra.mxu0 0.0
    %115 = vmatprep.subr.mxu0 0.0
    %116 = vmatpush1.xpose.msra.mxu0 0.0
    %117 = vmatprep.subr.mxu0 0.0
    %118 = vmatpush1.xpose.msra.mxu0 0.0
    %119 = vmatprep.subr.mxu0 0.0
    %120 = vmatpush1.xpose.msra.mxu0 0.0
    %121 = vmatprep.subr.mxu0 0.0
    %122 = vmatpush1.xpose.msra.mxu0 0.0
    %123 = vmatprep.subr.mxu0 0.0
    %124 = vmatpush1.xpose.msra.mxu0 0.0
    %125 = vmatprep.subr.mxu0 0.0
    %126 = vmatpush1.xpose.msra.mxu0 0.0
    %127 = vmatprep.subr.mxu0 0.0
    %128 = vmatpush1.xpose.msra.mxu0 0.0
    %129 = vmatprep.subr.mxu0 0.0
    %130 = vmatpush1.xpose.msra.mxu0 0.0
    %131 = vmatprep.subr.mxu0 0.0
    %132 = vmatpush1.xpose.msra.mxu0 0.0
    %133 = vmatprep.subr.mxu0 0.0
    %134 = vmatpush1.xpose.msra.mxu0 0.0
    %135 = vmatprep.subr.mxu0 0.0
    %136 = vmatpush1.xpose.msra.mxu0 0.0
    %137 = vmatprep.subr.mxu0 0.0
    %138 = vmatpush1.xpose.msra.mxu0 0.0
    %139 = vmatprep.subr.mxu0 0.0
    %140 = vmatpush1.xpose.msra.mxu0 0.0
    %141 = vmatprep.subr.mxu0 0.0
    %142 = vmatpush1.xpose.msra.mxu0 0.0
    %143 = vmatprep.subr.mxu0 0.0
    %144 = vmatpush1.xpose.msra.mxu0 0.0
    %145 = vmatprep.mubr.f32.mxu0 %v62
    %146 = vmatmul.mubr.f32.gmra.mrb[0].mxu0 %v61
    %v147 = vpop.f32.mrb[0].mxu0
    %v148 = vadd.f32 0.0, %v147
    %v149 = vpop.f32.mrb[0].mxu0
    %150 = vdwg.mxu0
    %151 = vmatprep.subr.mxu0 %v75
    %152 = vmatpush1.xpose.msra.mxu0 %v74
    %153 = vmatprep.subr.mxu0 0.0
    %154 = vmatpush1.xpose.msra.mxu0 0.0
    %155 = vmatprep.subr.mxu0 0.0
    %156 = vmatpush1.xpose.msra.mxu0 0.0
    %157 = vmatprep.subr.mxu0 0.0
    %158 = vmatpush1.xpose.msra.mxu0 0.0
    %159 = vmatprep.subr.mxu0 0.0
    %160 = vmatpush1.xpose.msra.mxu0 0.0
    %161 = vmatprep.subr.mxu0 0.0
    %162 = vmatpush1.xpose.msra.mxu0 0.0
    %163 = vmatprep.subr.mxu0 0.0
    %164 = vmatpush1.xpose.msra.mxu0 0.0
    %165 = vmatprep.subr.mxu0 0.0
    %166 = vmatpush1.xpose.msra.mxu0 0.0
    %167 = vmatprep.subr.mxu0 0.0
    %168 = vmatpush1.xpose.msra.mxu0 0.0
    %169 = vmatprep.subr.mxu0 0.0
    %170 = vmatpush1.xpose.msra.mxu0 0.0
    %171 = vmatprep.subr.mxu0 0.0
    %172 = vmatpush1.xpose.msra.mxu0 0.0
    %173 = vmatprep.subr.mxu0 0.0
    %174 = vmatpush1.xpose.msra.mxu0 0.0
    %175 = vmatprep.subr.mxu0 0.0
    %176 = vmatpush1.xpose.msra.mxu0 0.0
    %177 = vmatprep.subr.mxu0 0.0
    %178 = vmatpush1.xpose.msra.mxu0 0.0
    %179 = vmatprep.subr.mxu0 0.0
    %180 = vmatpush1.xpose.msra.mxu0 0.0
    %181 = vmatprep.subr.mxu0 0.0
    %182 = vmatpush1.xpose.msra.mxu0 0.0
    %183 = vmatprep.subr.mxu0 0.0
    %184 = vmatpush1.xpose.msra.mxu0 0.0
    %185 = vmatprep.subr.mxu0 0.0
    %186 = vmatpush1.xpose.msra.mxu0 0.0
    %187 = vmatprep.subr.mxu0 0.0
    %188 = vmatpush1.xpose.msra.mxu0 0.0
    %189 = vmatprep.subr.mxu0 0.0
    %190 = vmatpush1.xpose.msra.mxu0 0.0
    %191 = vmatprep.subr.mxu0 0.0
    %192 = vmatpush1.xpose.msra.mxu0 0.0
    %193 = vmatprep.subr.mxu0 0.0
    %194 = vmatpush1.xpose.msra.mxu0 0.0
    %195 = vmatprep.subr.mxu0 0.0
    %196 = vmatpush1.xpose.msra.mxu0 0.0
    %197 = vmatprep.subr.mxu0 0.0
    %198 = vmatpush1.xpose.msra.mxu0 0.0
    %199 = vmatprep.subr.mxu0 0.0
    %200 = vmatpush1.xpose.msra.mxu0 0.0
    %201 = vmatprep.subr.mxu0 0.0
    %202 = vmatpush1.xpose.msra.mxu0 0.0
    %203 = vmatprep.subr.mxu0 0.0
    %204 = vmatpush1.xpose.msra.mxu0 0.0
    %205 = vmatprep.subr.mxu0 0.0
    %206 = vmatpush1.xpose.msra.mxu0 0.0
    %207 = vmatprep.subr.mxu0 0.0
    %208 = vmatpush1.xpose.msra.mxu0 0.0
    %209 = vmatprep.subr.mxu0 0.0
    %210 = vmatpush1.xpose.msra.mxu0 0.0
    %211 = vmatprep.subr.mxu0 0.0
    %212 = vmatpush1.xpose.msra.mxu0 0.0
    %213 = vmatprep.subr.mxu0 0.0
    %214 = vmatpush1.xpose.msra.mxu0 0.0
    %215 = vmatprep.mubr.f32.mxu0 %v64
    %216 = vmatmul.mubr.f32.gmra.mrb[0].mxu0 %v63
    %v217 = vpop.f32.mrb[0].mxu0
    %v218 = vadd.f32 %v148, %v217
    %v219 = vpop.f32.mrb[0].mxu0
    %220 = vdwg.mxu0
    %221 = vmatprep.subr.mxu0 %v77
    %222 = vmatpush1.xpose.msra.mxu0 %v76
    %223 = vmatprep.subr.mxu0 0.0
    %224 = vmatpush1.xpose.msra.mxu0 0.0
    %225 = vmatprep.subr.mxu0 0.0
    %226 = vmatpush1.xpose.msra.mxu0 0.0
    %227 = vmatprep.subr.mxu0 0.0
    %228 = vmatpush1.xpose.msra.mxu0 0.0
    %229 = vmatprep.subr.mxu0 0.0
    %230 = vmatpush1.xpose.msra.mxu0 0.0
    %231 = vmatprep.subr.mxu0 0.0
    %232 = vmatpush1.xpose.msra.mxu0 0.0
    %233 = vmatprep.subr.mxu0 0.0
    %234 = vmatpush1.xpose.msra.mxu0 0.0
    %235 = vmatprep.subr.mxu0 0.0
    %236 = vmatpush1.xpose.msra.mxu0 0.0
    %237 = vmatprep.subr.mxu0 0.0
    %238 = vmatpush1.xpose.msra.mxu0 0.0
    %239 = vmatprep.subr.mxu0 0.0
    %240 = vmatpush1.xpose.msra.mxu0 0.0
    %241 = vmatprep.subr.mxu0 0.0
    %242 = vmatpush1.xpose.msra.mxu0 0.0
    %243 = vmatprep.subr.mxu0 0.0
    %244 = vmatpush1.xpose.msra.mxu0 0.0
    %245 = vmatprep.subr.mxu0 0.0
    %246 = vmatpush1.xpose.msra.mxu0 0.0
    %247 = vmatprep.subr.mxu0 0.0
    %248 = vmatpush1.xpose.msra.mxu0 0.0
    %249 = vmatprep.subr.mxu0 0.0
    %250 = vmatpush1.xpose.msra.mxu0 0.0
    %251 = vmatprep.subr.mxu0 0.0
    %252 = vmatpush1.xpose.msra.mxu0 0.0
    %253 = vmatprep.subr.mxu0 0.0
    %254 = vmatpush1.xpose.msra.mxu0 0.0
    %255 = vmatprep.subr.mxu0 0.0
    %256 = vmatpush1.xpose.msra.mxu0 0.0
    %257 = vmatprep.subr.mxu0 0.0
    %258 = vmatpush1.xpose.msra.mxu0 0.0
    %259 = vmatprep.subr.mxu0 0.0
    %260 = vmatpush1.xpose.msra.mxu0 0.0
    %261 = vmatprep.subr.mxu0 0.0
    %262 = vmatpush1.xpose.msra.mxu0 0.0
    %263 = vmatprep.subr.mxu0 0.0
    %264 = vmatpush1.xpose.msra.mxu0 0.0
    %265 = vmatprep.subr.mxu0 0.0
    %266 = vmatpush1.xpose.msra.mxu0 0.0
    %267 = vmatprep.subr.mxu0 0.0
    %268 = vmatpush1.xpose.msra.mxu0 0.0
    %269 = vmatprep.subr.mxu0 0.0
    %270 = vmatpush1.xpose.msra.mxu0 0.0
    %271 = vmatprep.subr.mxu0 0.0
    %272 = vmatpush1.xpose.msra.mxu0 0.0
    %273 = vmatprep.subr.mxu0 0.0
    %274 = vmatpush1.xpose.msra.mxu0 0.0
    %275 = vmatprep.subr.mxu0 0.0
    %276 = vmatpush1.xpose.msra.mxu0 0.0
    %277 = vmatprep.subr.mxu0 0.0
    %278 = vmatpush1.xpose.msra.mxu0 0.0
    %279 = vmatprep.subr.mxu0 0.0
    %280 = vmatpush1.xpose.msra.mxu0 0.0
    %281 = vmatprep.subr.mxu0 0.0
    %282 = vmatpush1.xpose.msra.mxu0 0.0
    %283 = vmatprep.subr.mxu0 0.0
    %284 = vmatpush1.xpose.msra.mxu0 0.0
    %285 = vmatprep.mubr.f32.mxu0 %v66
    %286 = vmatmul.mubr.f32.gmra.mrb[0].mxu0 %v65
    %v287 = vpop.f32.mrb[0].mxu0
    %v288 = vadd.f32 %v218, %v287
    %v289 = vpop.f32.mrb[0].mxu0
    %290 = vdwg.mxu0
    %291 = vmatprep.subr.mxu0 %v79
    %292 = vmatpush1.xpose.msra.mxu0 %v78
    %293 = vmatprep.subr.mxu0 0.0
    %294 = vmatpush1.xpose.msra.mxu0 0.0
    %295 = vmatprep.subr.mxu0 0.0
    %296 = vmatpush1.xpose.msra.mxu0 0.0
    %297 = vmatprep.subr.mxu0 0.0
    %298 = vmatpush1.xpose.msra.mxu0 0.0
    %299 = vmatprep.subr.mxu0 0.0
    %300 = vmatpush1.xpose.msra.mxu0 0.0
    %301 = vmatprep.subr.mxu0 0.0
    %302 = vmatpush1.xpose.msra.mxu0 0.0
    %303 = vmatprep.subr.mxu0 0.0
    %304 = vmatpush1.xpose.msra.mxu0 0.0
    %305 = vmatprep.subr.mxu0 0.0
    %306 = vmatpush1.xpose.msra.mxu0 0.0
    %307 = vmatprep.subr.mxu0 0.0
    %308 = vmatpush1.xpose.msra.mxu0 0.0
    %309 = vmatprep.subr.mxu0 0.0
    %310 = vmatpush1.xpose.msra.mxu0 0.0
    %311 = vmatprep.subr.mxu0 0.0
    %312 = vmatpush1.xpose.msra.mxu0 0.0
    %313 = vmatprep.subr.mxu0 0.0
    %314 = vmatpush1.xpose.msra.mxu0 0.0
    %315 = vmatprep.subr.mxu0 0.0
    %316 = vmatpush1.xpose.msra.mxu0 0.0
    %317 = vmatprep.subr.mxu0 0.0
    %318 = vmatpush1.xpose.msra.mxu0 0.0
    %319 = vmatprep.subr.mxu0 0.0
    %320 = vmatpush1.xpose.msra.mxu0 0.0
    %321 = vmatprep.subr.mxu0 0.0
    %322 = vmatpush1.xpose.msra.mxu0 0.0
    %323 = vmatprep.subr.mxu0 0.0
    %324 = vmatpush1.xpose.msra.mxu0 0.0
    %325 = vmatprep.subr.mxu0 0.0
    %326 = vmatpush1.xpose.msra.mxu0 0.0
    %327 = vmatprep.subr.mxu0 0.0
    %328 = vmatpush1.xpose.msra.mxu0 0.0
    %329 = vmatprep.subr.mxu0 0.0
    %330 = vmatpush1.xpose.msra.mxu0 0.0
    %331 = vmatprep.subr.mxu0 0.0
    %332 = vmatpush1.xpose.msra.mxu0 0.0
    %333 = vmatprep.subr.mxu0 0.0
    %334 = vmatpush1.xpose.msra.mxu0 0.0
    %335 = vmatprep.subr.mxu0 0.0
    %336 = vmatpush1.xpose.msra.mxu0 0.0
    %337 = vmatprep.subr.mxu0 0.0
    %338 = vmatpush1.xpose.msra.mxu0 0.0
    %339 = vmatprep.subr.mxu0 0.0
    %340 = vmatpush1.xpose.msra.mxu0 0.0
    %341 = vmatprep.subr.mxu0 0.0
    %342 = vmatpush1.xpose.msra.mxu0 0.0
    %343 = vmatprep.subr.mxu0 0.0
    %344 = vmatpush1.xpose.msra.mxu0 0.0
    %345 = vmatprep.subr.mxu0 0.0
    %346 = vmatpush1.xpose.msra.mxu0 0.0
    %347 = vmatprep.subr.mxu0 0.0
    %348 = vmatpush1.xpose.msra.mxu0 0.0
    %349 = vmatprep.subr.mxu0 0.0
    %350 = vmatpush1.xpose.msra.mxu0 0.0
    %351 = vmatprep.subr.mxu0 0.0
    %352 = vmatpush1.xpose.msra.mxu0 0.0
    %353 = vmatprep.subr.mxu0 0.0
    %354 = vmatpush1.xpose.msra.mxu0 0.0
    %355 = vmatprep.mubr.f32.mxu0 %v68
    %356 = vmatmul.mubr.f32.gmra.mrb[0].mxu0 %v67
    %v357 = vpop.f32.mrb[0].mxu0
    %v358 = vadd.f32 %v288, %v357
    %v359 = vpop.f32.mrb[0].mxu0
    %360 = vdwg.mxu0
    %v361 = vadd.f32 %v80, %v358
    %vm362 = vcmask 64512
    %363 = vst.msk [vmem:[#allocation2] sm:$0xff] %vm362, %v361
    %v364 = vld [vmem:[#allocation3] sm:$0xff]
    %365 = vmatprep.subr.mxu0 %v62
    %366 = vmatpush1.xpose.msra.mxu0 %v61
    %367 = vmatprep.subr.mxu0 0.0
    %368 = vmatpush1.xpose.msra.mxu0 0.0
    %369 = vmatprep.subr.mxu0 0.0
    %370 = vmatpush1.xpose.msra.mxu0 0.0
    %371 = vmatprep.subr.mxu0 0.0
    %372 = vmatpush1.xpose.msra.mxu0 0.0
    %373 = vmatprep.subr.mxu0 0.0
    %374 = vmatpush1.xpose.msra.mxu0 0.0
    %375 = vmatprep.subr.mxu0 0.0
    %376 = vmatpush1.xpose.msra.mxu0 0.0
    %377 = vmatprep.subr.mxu0 0.0
    %378 = vmatpush1.xpose.msra.mxu0 0.0
    %379 = vmatprep.subr.mxu0 0.0
    %380 = vmatpush1.xpose.msra.mxu0 0.0
    %381 = vmatprep.subr.mxu0 0.0
    %382 = vmatpush1.xpose.msra.mxu0 0.0
    %383 = vmatprep.subr.mxu0 0.0
    %384 = vmatpush1.xpose.msra.mxu0 0.0
    %385 = vmatprep.subr.mxu0 0.0
    %386 = vmatpush1.xpose.msra.mxu0 0.0
    %387 = vmatprep.subr.mxu0 0.0
    %388 = vmatpush1.xpose.msra.mxu0 0.0
    %389 = vmatprep.subr.mxu0 0.0
    %390 = vmatpush1.xpose.msra.mxu0 0.0
    %391 = vmatprep.subr.mxu0 0.0
    %392 = vmatpush1.xpose.msra.mxu0 0.0
    %393 = vmatprep.subr.mxu0 0.0
    %394 = vmatpush1.xpose.msra.mxu0 0.0
    %395 = vmatprep.subr.mxu0 0.0
    %396 = vmatpush1.xpose.msra.mxu0 0.0
    %397 = vmatprep.subr.mxu0 0.0
    %398 = vmatpush1.xpose.msra.mxu0 0.0
    %399 = vmatprep.subr.mxu0 0.0
    %400 = vmatpush1.xpose.msra.mxu0 0.0
    %401 = vmatprep.subr.mxu0 0.0
    %402 = vmatpush1.xpose.msra.mxu0 0.0
    %403 = vmatprep.subr.mxu0 0.0
    %404 = vmatpush1.xpose.msra.mxu0 0.0
    %405 = vmatprep.subr.mxu0 0.0
    %406 = vmatpush1.xpose.msra.mxu0 0.0
    %407 = vmatprep.subr.mxu0 0.0
    %408 = vmatpush1.xpose.msra.mxu0 0.0
    %409 = vmatprep.subr.mxu0 0.0
    %410 = vmatpush1.xpose.msra.mxu0 0.0
    %411 = vmatprep.subr.mxu0 0.0
    %412 = vmatpush1.xpose.msra.mxu0 0.0
    %413 = vmatprep.subr.mxu0 0.0
    %414 = vmatpush1.xpose.msra.mxu0 0.0
    %415 = vmatprep.subr.mxu0 0.0
    %416 = vmatpush1.xpose.msra.mxu0 0.0
    %417 = vmatprep.subr.mxu0 0.0
    %418 = vmatpush1.xpose.msra.mxu0 0.0
    %419 = vmatprep.subr.mxu0 0.0
    %420 = vmatpush1.xpose.msra.mxu0 0.0
    %421 = vmatprep.subr.mxu0 0.0
    %422 = vmatpush1.xpose.msra.mxu0 0.0
    %423 = vmatprep.subr.mxu0 0.0
    %424 = vmatpush1.xpose.msra.mxu0 0.0
    %425 = vmatprep.subr.mxu0 0.0
    %426 = vmatpush1.xpose.msra.mxu0 0.0
    %427 = vmatprep.subr.mxu0 0.0
    %428 = vmatpush1.xpose.msra.mxu0 0.0
    %429 = vmatprep.mubr.f32.mxu0 %v62
    %430 = vmatmul.mubr.f32.gmra.mrb[0].mxu0 %v61
    %v431 = vpop.f32.mrb[0].mxu0
    %v432 = vadd.f32 0.0, %v431
    %v433 = vpop.f32.mrb[0].mxu0
    %434 = vdwg.mxu0
    %435 = vmatprep.subr.mxu0 %v64
    %436 = vmatpush1.xpose.msra.mxu0 %v63
    %437 = vmatprep.subr.mxu0 0.0
    %438 = vmatpush1.xpose.msra.mxu0 0.0
    %439 = vmatprep.subr.mxu0 0.0
    %440 = vmatpush1.xpose.msra.mxu0 0.0
    %441 = vmatprep.subr.mxu0 0.0
    %442 = vmatpush1.xpose.msra.mxu0 0.0
    %443 = vmatprep.subr.mxu0 0.0
    %444 = vmatpush1.xpose.msra.mxu0 0.0
    %445 = vmatprep.subr.mxu0 0.0
    %446 = vmatpush1.xpose.msra.mxu0 0.0
    %447 = vmatprep.subr.mxu0 0.0
    %448 = vmatpush1.xpose.msra.mxu0 0.0
    %449 = vmatprep.subr.mxu0 0.0
    %450 = vmatpush1.xpose.msra.mxu0 0.0
    %451 = vmatprep.subr.mxu0 0.0
    %452 = vmatpush1.xpose.msra.mxu0 0.0
    %453 = vmatprep.subr.mxu0 0.0
    %454 = vmatpush1.xpose.msra.mxu0 0.0
    %455 = vmatprep.subr.mxu0 0.0
    %456 = vmatpush1.xpose.msra.mxu0 0.0
    %457 = vmatprep.subr.mxu0 0.0
    %458 = vmatpush1.xpose.msra.mxu0 0.0
    %459 = vmatprep.subr.mxu0 0.0
    %460 = vmatpush1.xpose.msra.mxu0 0.0
    %461 = vmatprep.subr.mxu0 0.0
    %462 = vmatpush1.xpose.msra.mxu0 0.0
    %463 = vmatprep.subr.mxu0 0.0
    %464 = vmatpush1.xpose.msra.mxu0 0.0
    %465 = vmatprep.subr.mxu0 0.0
    %466 = vmatpush1.xpose.msra.mxu0 0.0
    %467 = vmatprep.subr.mxu0 0.0
    %468 = vmatpush1.xpose.msra.mxu0 0.0
    %469 = vmatprep.subr.mxu0 0.0
    %470 = vmatpush1.xpose.msra.mxu0 0.0
    %471 = vmatprep.subr.mxu0 0.0
    %472 = vmatpush1.xpose.msra.mxu0 0.0
    %473 = vmatprep.subr.mxu0 0.0
    %474 = vmatpush1.xpose.msra.mxu0 0.0
    %475 = vmatprep.subr.mxu0 0.0
    %476 = vmatpush1.xpose.msra.mxu0 0.0
    %477 = vmatprep.subr.mxu0 0.0
    %478 = vmatpush1.xpose.msra.mxu0 0.0
    %479 = vmatprep.subr.mxu0 0.0
    %480 = vmatpush1.xpose.msra.mxu0 0.0
    %481 = vmatprep.subr.mxu0 0.0
    %482 = vmatpush1.xpose.msra.mxu0 0.0
    %483 = vmatprep.subr.mxu0 0.0
    %484 = vmatpush1.xpose.msra.mxu0 0.0
    %485 = vmatprep.subr.mxu0 0.0
    %486 = vmatpush1.xpose.msra.mxu0 0.0
    %487 = vmatprep.subr.mxu0 0.0
    %488 = vmatpush1.xpose.msra.mxu0 0.0
    %489 = vmatprep.subr.mxu0 0.0
    %490 = vmatpush1.xpose.msra.mxu0 0.0
    %491 = vmatprep.subr.mxu0 0.0
    %492 = vmatpush1.xpose.msra.mxu0 0.0
    %493 = vmatprep.subr.mxu0 0.0
    %494 = vmatpush1.xpose.msra.mxu0 0.0
    %495 = vmatprep.subr.mxu0 0.0
    %496 = vmatpush1.xpose.msra.mxu0 0.0
    %497 = vmatprep.subr.mxu0 0.0
    %498 = vmatpush1.xpose.msra.mxu0 0.0
    %499 = vmatprep.mubr.f32.mxu0 %v64
    %500 = vmatmul.mubr.f32.gmra.mrb[0].mxu0 %v63
    %v501 = vpop.f32.mrb[0].mxu0
    %v502 = vadd.f32 %v432, %v501
    %v503 = vpop.f32.mrb[0].mxu0
    %504 = vdwg.mxu0
    %505 = vmatprep.subr.mxu0 %v66
    %506 = vmatpush1.xpose.msra.mxu0 %v65
    %507 = vmatprep.subr.mxu0 0.0
    %508 = vmatpush1.xpose.msra.mxu0 0.0
    %509 = vmatprep.subr.mxu0 0.0
    %510 = vmatpush1.xpose.msra.mxu0 0.0
    %511 = vmatprep.subr.mxu0 0.0
    %512 = vmatpush1.xpose.msra.mxu0 0.0
    %513 = vmatprep.subr.mxu0 0.0
    %514 = vmatpush1.xpose.msra.mxu0 0.0
    %515 = vmatprep.subr.mxu0 0.0
    %516 = vmatpush1.xpose.msra.mxu0 0.0
    %517 = vmatprep.subr.mxu0 0.0
    %518 = vmatpush1.xpose.msra.mxu0 0.0
    %519 = vmatprep.subr.mxu0 0.0
    %520 = vmatpush1.xpose.msra.mxu0 0.0
    %521 = vmatprep.subr.mxu0 0.0
    %522 = vmatpush1.xpose.msra.mxu0 0.0
    %523 = vmatprep.subr.mxu0 0.0
    %524 = vmatpush1.xpose.msra.mxu0 0.0
    %525 = vmatprep.subr.mxu0 0.0
    %526 = vmatpush1.xpose.msra.mxu0 0.0
    %527 = vmatprep.subr.mxu0 0.0
    %528 = vmatpush1.xpose.msra.mxu0 0.0
    %529 = vmatprep.subr.mxu0 0.0
    %530 = vmatpush1.xpose.msra.mxu0 0.0
    %531 = vmatprep.subr.mxu0 0.0
    %532 = vmatpush1.xpose.msra.mxu0 0.0
    %533 = vmatprep.subr.mxu0 0.0
    %534 = vmatpush1.xpose.msra.mxu0 0.0
    %535 = vmatprep.subr.mxu0 0.0
    %536 = vmatpush1.xpose.msra.mxu0 0.0
    %537 = vmatprep.subr.mxu0 0.0
    %538 = vmatpush1.xpose.msra.mxu0 0.0
    %539 = vmatprep.subr.mxu0 0.0
    %540 = vmatpush1.xpose.msra.mxu0 0.0
    %541 = vmatprep.subr.mxu0 0.0
    %542 = vmatpush1.xpose.msra.mxu0 0.0
    %543 = vmatprep.subr.mxu0 0.0
    %544 = vmatpush1.xpose.msra.mxu0 0.0
    %545 = vmatprep.subr.mxu0 0.0
    %546 = vmatpush1.xpose.msra.mxu0 0.0
    %547 = vmatprep.subr.mxu0 0.0
    %548 = vmatpush1.xpose.msra.mxu0 0.0
    %549 = vmatprep.subr.mxu0 0.0
    %550 = vmatpush1.xpose.msra.mxu0 0.0
    %551 = vmatprep.subr.mxu0 0.0
    %552 = vmatpush1.xpose.msra.mxu0 0.0
    %553 = vmatprep.subr.mxu0 0.0
    %554 = vmatpush1.xpose.msra.mxu0 0.0
    %555 = vmatprep.subr.mxu0 0.0
    %556 = vmatpush1.xpose.msra.mxu0 0.0
    %557 = vmatprep.subr.mxu0 0.0
    %558 = vmatpush1.xpose.msra.mxu0 0.0
    %559 = vmatprep.subr.mxu0 0.0
    %560 = vmatpush1.xpose.msra.mxu0 0.0
    %561 = vmatprep.subr.mxu0 0.0
    %562 = vmatpush1.xpose.msra.mxu0 0.0
    %563 = vmatprep.subr.mxu0 0.0
    %564 = vmatpush1.xpose.msra.mxu0 0.0
    %565 = vmatprep.subr.mxu0 0.0
    %566 = vmatpush1.xpose.msra.mxu0 0.0
    %567 = vmatprep.subr.mxu0 0.0
    %568 = vmatpush1.xpose.msra.mxu0 0.0
    %569 = vmatprep.mubr.f32.mxu0 %v66
    %570 = vmatmul.mubr.f32.gmra.mrb[0].mxu0 %v65
    %v571 = vpop.f32.mrb[0].mxu0
    %v572 = vadd.f32 %v502, %v571
    %v573 = vpop.f32.mrb[0].mxu0
    %574 = vdwg.mxu0
    %575 = vmatprep.subr.mxu0 %v68
    %576 = vmatpush1.xpose.msra.mxu0 %v67
    %577 = vmatprep.subr.mxu0 0.0
    %578 = vmatpush1.xpose.msra.mxu0 0.0
    %579 = vmatprep.subr.mxu0 0.0
    %580 = vmatpush1.xpose.msra.mxu0 0.0
    %581 = vmatprep.subr.mxu0 0.0
    %582 = vmatpush1.xpose.msra.mxu0 0.0
    %583 = vmatprep.subr.mxu0 0.0
    %584 = vmatpush1.xpose.msra.mxu0 0.0
    %585 = vmatprep.subr.mxu0 0.0
    %586 = vmatpush1.xpose.msra.mxu0 0.0
    %587 = vmatprep.subr.mxu0 0.0
    %588 = vmatpush1.xpose.msra.mxu0 0.0
    %589 = vmatprep.subr.mxu0 0.0
    %590 = vmatpush1.xpose.msra.mxu0 0.0
    %591 = vmatprep.subr.mxu0 0.0
    %592 = vmatpush1.xpose.msra.mxu0 0.0
    %593 = vmatprep.subr.mxu0 0.0
    %594 = vmatpush1.xpose.msra.mxu0 0.0
    %595 = vmatprep.subr.mxu0 0.0
    %596 = vmatpush1.xpose.msra.mxu0 0.0
    %597 = vmatprep.subr.mxu0 0.0
    %598 = vmatpush1.xpose.msra.mxu0 0.0
    %599 = vmatprep.subr.mxu0 0.0
    %600 = vmatpush1.xpose.msra.mxu0 0.0
    %601 = vmatprep.subr.mxu0 0.0
    %602 = vmatpush1.xpose.msra.mxu0 0.0
    %603 = vmatprep.subr.mxu0 0.0
    %604 = vmatpush1.xpose.msra.mxu0 0.0
    %605 = vmatprep.subr.mxu0 0.0
    %606 = vmatpush1.xpose.msra.mxu0 0.0
    %607 = vmatprep.subr.mxu0 0.0
    %608 = vmatpush1.xpose.msra.mxu0 0.0
    %609 = vmatprep.subr.mxu0 0.0
    %610 = vmatpush1.xpose.msra.mxu0 0.0
    %611 = vmatprep.subr.mxu0 0.0
    %612 = vmatpush1.xpose.msra.mxu0 0.0
    %613 = vmatprep.subr.mxu0 0.0
    %614 = vmatpush1.xpose.msra.mxu0 0.0
    %615 = vmatprep.subr.mxu0 0.0
    %616 = vmatpush1.xpose.msra.mxu0 0.0
    %617 = vmatprep.subr.mxu0 0.0
    %618 = vmatpush1.xpose.msra.mxu0 0.0
    %619 = vmatprep.subr.mxu0 0.0
    %620 = vmatpush1.xpose.msra.mxu0 0.0
    %621 = vmatprep.subr.mxu0 0.0
    %622 = vmatpush1.xpose.msra.mxu0 0.0
    %623 = vmatprep.subr.mxu0 0.0
    %624 = vmatpush1.xpose.msra.mxu0 0.0
    %625 = vmatprep.subr.mxu0 0.0
    %626 = vmatpush1.xpose.msra.mxu0 0.0
    %627 = vmatprep.subr.mxu0 0.0
    %628 = vmatpush1.xpose.msra.mxu0 0.0
    %629 = vmatprep.subr.mxu0 0.0
    %630 = vmatpush1.xpose.msra.mxu0 0.0
    %631 = vmatprep.subr.mxu0 0.0
    %632 = vmatpush1.xpose.msra.mxu0 0.0
    %633 = vmatprep.subr.mxu0 0.0
    %634 = vmatpush1.xpose.msra.mxu0 0.0
    %635 = vmatprep.subr.mxu0 0.0
    %636 = vmatpush1.xpose.msra.mxu0 0.0
    %637 = vmatprep.subr.mxu0 0.0
    %638 = vmatpush1.xpose.msra.mxu0 0.0
    %639 = vmatprep.mubr.f32.mxu0 %v68
    %640 = vmatmul.mubr.f32.gmra.mrb[0].mxu0 %v67
    %v641 = vpop.f32.mrb[0].mxu0
    %v642 = vadd.f32 %v572, %v641
    %v643 = vpop.f32.mrb[0].mxu0
    %644 = vdwg.mxu0
    %v645 = vadd.f32 %v364, %v642
    %646 = vst.msk [vmem:[#allocation3] sm:$0xff] %vm362, %v645
    %s647 = smul.addr %s69, 8
    %s648 = scalar_lea.vmem [#allocation4], %s647
    %649 = vst [vmem:[%s648] sm:$0xff] %v61
    %650 = vst [vmem:[%s648 + $0x8] sm:$0xff] %v62
    %651 = vst [vmem:[%s648 + $0x10] sm:$0xff] %v63
    %652 = vst [vmem:[%s648 + $0x18] sm:$0xff] %v64
    %653 = vst [vmem:[%s648 + $0x20] sm:$0xff] %v65
    %654 = vst [vmem:[%s648 + $0x28] sm:$0xff] %v66
    %655 = vst [vmem:[%s648 + $0x30] sm:$0xff] %v67
    %656 = vst [vmem:[%s648 + $0x38] sm:$0xff] %v68
    // Predicated region
    $region30: #{tpu_custom_call.1} parent=1 // pred_check
      %p657 = pneg %p54
    $region31: #{tpu_custom_call.1} parent=1 // pred_check_branch
      %659 = sbr.rel (%p657) target = $region33
    $region32: #{tpu_custom_call.1} parent=1 // pred_region
      %v660 = vld [vmem:[#allocation10] sm:$0x1]
      %v661 = vld [vmem:[#allocation3] sm:$0xff]
      %v662 = vlaneseq
      %v663 = vshrl.u32 %v662, 7
      %vm664 = vcmp.lt.s32.totalorder %v663, 2
      %v665 = vlaneseq
      %v666 = vand.u32 %v665, 127
      %vm667 = vcmp.lt.s32.totalorder %v666, 8
      %v668 = vld [vmem:[#allocation2] sm:$0xff]
      %v670 = vlaneseq
      %v671 = vshrl.u32 %v670, 7
      %v672 = vsub.s32 0, %v671
      %v673 = vrot.slane %v660, %v672
      %v675 = vadd.f32 %v668, %v673
      %v676 = vsel %vm667, %v675, -1e+30
      %v677 = vsel %vm362, %v676, -inf
      %678 = vmax.xlane.f32.xlu0 %v677
      %v679 = vpop.xlane.xlu0 %678
      %v680 = vsub.f32 %v676, %v679
      %v681 = vmul.f32 %v680, 1.442695
      %v682 = vpow.pop %v681
      %v683 = vsel %vm362, %v682, 0.0
      %684 = vadd.xlane.f32.xlu0 %v683
      %v685 = vpop.xlane.xlu0 %684
      %v686 = vrcp.pop %v685
      %v687 = vmul.f32 %v682, %v686
      %v688 = vlog2.pop %v685
      %v689 = vmul.f32 %v688, 0.6931472
      %v690 = vsub.f32 %v680, %v689
      %v691 = vmul.f32 %v687, %v690
      %v692 = vsel %vm667, %v691, 0.0
      %v693 = vsel %vm362, %v692, 0.0
      %694 = vadd.xlane.f32.xlu0 %v693
      %v695 = vpop.xlane.xlu0 %694
      %v696 = vsub.f32 0.0, %v695
      %v697 = vadd.f32 %v690, %v696
      %v698 = vmul.f32 %v687, %v697
      %v699 = vsub.f32 0.0, %v698
      %v700 = vmul.f32 %v699, 0.005
      %vm701 = vmand %vm664, %vm667
      %v702 = vsel %vm701, %v700, 0.0
      %v703 = vsel %vm362, %v702, 0.0
      %v704 = vrot.slane %v703, 4
      %v705 = vadd.f32 %v703, %v704
      %v706 = vrot.slane %v705, 2
      %v707 = vadd.f32 %v705, %v706
      %v708 = vrot.slane %v707, 1
      %v709 = vadd.f32 %v707, %v708
      %v711 = vsel %vm362, %v661, 0
      %713 = vmatprep.subr.mxu0 0.0
      %714 = vmatpush1.msra.mxu0 %v702
      %715 = vmatprep.subr.mxu0 0.0
      %716 = vmatpush1.msra.mxu0 0.0
      %717 = vmatprep.subr.mxu0 0.0
      %718 = vmatpush1.msra.mxu0 0.0
      %719 = vmatprep.subr.mxu0 0.0
      %720 = vmatpush1.msra.mxu0 0.0
      %721 = vmatprep.subr.mxu0 0.0
      %722 = vmatpush1.msra.mxu0 0.0
      %723 = vmatprep.subr.mxu0 0.0
      %724 = vmatpush1.msra.mxu0 0.0
      %725 = vmatprep.subr.mxu0 0.0
      %726 = vmatpush1.msra.mxu0 0.0
      %727 = vmatprep.subr.mxu0 0.0
      %728 = vmatpush1.msra.mxu0 0.0
      %729 = vmatprep.subr.mxu0 0.0
      %730 = vmatpush1.msra.mxu0 0.0
      %731 = vmatprep.subr.mxu0 0.0
      %732 = vmatpush1.msra.mxu0 0.0
      %733 = vmatprep.subr.mxu0 0.0
      %734 = vmatpush1.msra.mxu0 0.0
      %735 = vmatprep.subr.mxu0 0.0
      %736 = vmatpush1.msra.mxu0 0.0
      %737 = vmatprep.subr.mxu0 0.0
      %738 = vmatpush1.msra.mxu0 0.0
      %739 = vmatprep.subr.mxu0 0.0
      %740 = vmatpush1.msra.mxu0 0.0
      %741 = vmatprep.subr.mxu0 0.0
      %742 = vmatpush1.msra.mxu0 0.0
      %743 = vmatprep.subr.mxu0 0.0
      %744 = vmatpush1.msra.mxu0 0.0
      %745 = vmatprep.subr.mxu0 0.0
      %746 = vmatpush1.msra.mxu0 0.0
      %747 = vmatprep.subr.mxu0 0.0
      %748 = vmatpush1.msra.mxu0 0.0
      %749 = vmatprep.subr.mxu0 0.0
      %750 = vmatpush1.msra.mxu0 0.0
      %751 = vmatprep.subr.mxu0 0.0
      %752 = vmatpush1.msra.mxu0 0.0
      %753 = vmatprep.subr.mxu0 0.0
      %754 = vmatpush1.msra.mxu0 0.0
      %755 = vmatprep.subr.mxu0 0.0
      %756 = vmatpush1.msra.mxu0 0.0
      %757 = vmatprep.subr.mxu0 0.0
      %758 = vmatpush1.msra.mxu0 0.0
      %759 = vmatprep.subr.mxu0 0.0
      %760 = vmatpush1.msra.mxu0 0.0
      %761 = vmatprep.subr.mxu0 0.0
      %762 = vmatpush1.msra.mxu0 0.0
      %763 = vmatprep.subr.mxu0 0.0
      %764 = vmatpush1.msra.mxu0 0.0
      %765 = vmatprep.subr.mxu0 0.0
      %766 = vmatpush1.msra.mxu0 0.0
      %767 = vmatprep.subr.mxu0 0.0
      %768 = vmatpush1.msra.mxu0 0.0
      %769 = vmatprep.subr.mxu0 0.0
      %770 = vmatpush1.msra.mxu0 0.0
      %771 = vmatprep.subr.mxu0 0.0
      %772 = vmatpush1.msra.mxu0 0.0
      %773 = vmatprep.subr.mxu0 0.0
      %774 = vmatpush1.msra.mxu0 0.0
      %775 = vmatprep.subr.mxu0 0.0
      %776 = vmatpush1.msra.mxu0 0.0
      %777 = vmatprep.mubr.f32.mxu0 0.0
      %778 = vmatmul.mubr.f32.gmra.mrb[0].mxu0 %v711
      %v779 = vpop.f32.mrb[0].mxu0
      %v780 = vadd.f32 0.0, %v779
      %v781 = vpop.f32.mrb[0].mxu0
      %782 = vdwg.mxu0
      %v783 = vsub.f32 %v675, %v780
      %v784 = vsub.f32 %v783, %v709
      %v785 = vadd.f32 %v702, 0.0
      %786 = vst.msk [vmem:[#allocation11] sm:$0xff] %vm362, %v784
      %v787 = vsel %vm362, %v785, 0.0
      %v788 = vrot.slane %v787, 4
      %v789 = vadd.f32 %v787, %v788
      %v790 = vrot.slane %v789, 2
      %v791 = vadd.f32 %v789, %v790
      %v792 = vrot.slane %v791, 1
      %v793 = vadd.f32 %v791, %v792
      %v794 = vsub.f32 %v660, %v793
      %vm795 = vcmask 57344
      %796 = vst.msk [vmem:[#allocation14] sm:$0x1] %vm795, %v794
      %v797 = vld [vmem:[#allocation4] sm:$0xff]
      %v798 = vld [vmem:[#allocation4 + $0x8] sm:$0xff]
      %v799 = vld [vmem:[#allocation4 + $0x10] sm:$0xff]
      %v800 = vld [vmem:[#allocation4 + $0x18] sm:$0xff]
      %v801 = vld [vmem:[#allocation4 + $0x20] sm:$0xff]
      %v802 = vld [vmem:[#allocation4 + $0x28] sm:$0xff]
      %v803 = vld [vmem:[#allocation4 + $0x30] sm:$0xff]
      %v804 = vld [vmem:[#allocation4 + $0x38] sm:$0xff]
      %805 = vxpose.xlu0.b32.start [1/16] %v785, 128
      %806 = vxpose.xlu0.b32.cont [2/16] 0.0, 128
      %807 = vxpose.xlu0.b32.cont [3/16] 0.0, 128
      %808 = vxpose.xlu0.b32.cont [4/16] 0.0, 128
      %809 = vxpose.xlu0.b32.cont [5/16] 0.0, 128
      %810 = vxpose.xlu0.b32.cont [6/16] 0.0, 128
      %811 = vxpose.xlu0.b32.cont [7/16] 0.0, 128
      %812 = vxpose.xlu0.b32.cont [8/16] 0.0, 128
      %813 = vxpose.xlu0.b32.cont [9/16] 0.0, 128
      %814 = vxpose.xlu0.b32.cont [10/16] 0.0, 128
      %815 = vxpose.xlu0.b32.cont [11/16] 0.0, 128
      %816 = vxpose.xlu0.b32.cont [12/16] 0.0, 128
      %817 = vxpose.xlu0.b32.cont [13/16] 0.0, 128
      %818 = vxpose.xlu0.b32.cont [14/16] 0.0, 128
      %819 = vxpose.xlu0.b32.cont [15/16] 0.0, 128
      %820 = vxpose.xlu0.b32.end [16/16] 0.0, 128
      %v821 = vpop.trf.xlu0
      %v822 = vpop.trf.xlu0
      %v823 = vpop.trf.xlu0
      %v824 = vpop.trf.xlu0
      %v825 = vpop.trf.xlu0
      %v826 = vpop.trf.xlu0
      %v827 = vpop.trf.xlu0
      %v828 = vpop.trf.xlu0
      %v829 = vpop.trf.xlu0
      %v830 = vpop.trf.xlu0
      %v831 = vpop.trf.xlu0
      %v832 = vpop.trf.xlu0
      %v833 = vpop.trf.xlu0
      %v834 = vpop.trf.xlu0
      %v835 = vpop.trf.xlu0
      %v836 = vpop.trf.xlu0
      %v838 = vsel %vm362, %v821, 0
      %840 = vmatprep.subr.mxu0 %v798
      %841 = vmatpush1.msra.mxu0 %v797
      %842 = vmatprep.subr.mxu0 0.0
      %843 = vmatpush1.msra.mxu0 0.0
      %844 = vmatprep.subr.mxu0 0.0
      %845 = vmatpush1.msra.mxu0 0.0
      %846 = vmatprep.subr.mxu0 0.0
      %847 = vmatpush1.msra.mxu0 0.0
      %848 = vmatprep.subr.mxu0 0.0
      %849 = vmatpush1.msra.mxu0 0.0
      %850 = vmatprep.subr.mxu0 0.0
      %851 = vmatpush1.msra.mxu0 0.0
      %852 = vmatprep.subr.mxu0 0.0
      %853 = vmatpush1.msra.mxu0 0.0
      %854 = vmatprep.subr.mxu0 0.0
      %855 = vmatpush1.msra.mxu0 0.0
      %856 = vmatprep.subr.mxu0 0.0
      %857 = vmatpush1.msra.mxu0 0.0
      %858 = vmatprep.subr.mxu0 0.0
      %859 = vmatpush1.msra.mxu0 0.0
      %860 = vmatprep.subr.mxu0 0.0
      %861 = vmatpush1.msra.mxu0 0.0
      %862 = vmatprep.subr.mxu0 0.0
      %863 = vmatpush1.msra.mxu0 0.0
      %864 = vmatprep.subr.mxu0 0.0
      %865 = vmatpush1.msra.mxu0 0.0
      %866 = vmatprep.subr.mxu0 0.0
      %867 = vmatpush1.msra.mxu0 0.0
      %868 = vmatprep.subr.mxu0 0.0
      %869 = vmatpush1.msra.mxu0 0.0
      %870 = vmatprep.subr.mxu0 0.0
      %871 = vmatpush1.msra.mxu0 0.0
      %872 = vmatprep.subr.mxu0 0.0
      %873 = vmatpush1.msra.mxu0 0.0
      %874 = vmatprep.subr.mxu0 0.0
      %875 = vmatpush1.msra.mxu0 0.0
      %876 = vmatprep.subr.mxu0 0.0
      %877 = vmatpush1.msra.mxu0 0.0
      %878 = vmatprep.subr.mxu0 0.0
      %879 = vmatpush1.msra.mxu0 0.0
      %880 = vmatprep.subr.mxu0 0.0
      %881 = vmatpush1.msra.mxu0 0.0
      %882 = vmatprep.subr.mxu0 0.0
      %883 = vmatpush1.msra.mxu0 0.0
      %884 = vmatprep.subr.mxu0 0.0
      %885 = vmatpush1.msra.mxu0 0.0
      %886 = vmatprep.subr.mxu0 0.0
      %887 = vmatpush1.msra.mxu0 0.0
      %888 = vmatprep.subr.mxu0 0.0
      %889 = vmatpush1.msra.mxu0 0.0
      %890 = vmatprep.subr.mxu0 0.0
      %891 = vmatpush1.msra.mxu0 0.0
      %892 = vmatprep.subr.mxu0 0.0
      %893 = vmatpush1.msra.mxu0 0.0
      %894 = vmatprep.subr.mxu0 0.0
      %895 = vmatpush1.msra.mxu0 0.0
      %896 = vmatprep.subr.mxu0 0.0
      %897 = vmatpush1.msra.mxu0 0.0
      %898 = vmatprep.subr.mxu0 0.0
      %899 = vmatpush1.msra.mxu0 0.0
      %900 = vmatprep.subr.mxu0 0.0
      %901 = vmatpush1.msra.mxu0 0.0
      %902 = vmatprep.subr.mxu0 0.0
      %903 = vmatpush1.msra.mxu0 0.0
      %904 = vmatprep.mubr.f32.mxu0 0.0
      %905 = vmatmul.mubr.f32.gmra.mrb[0].mxu0 %v838
      %v906 = vpop.f32.mrb[0].mxu0
      %v907 = vadd.f32 0.0, %v906
      %v908 = vpop.f32.mrb[0].mxu0
      %v909 = vadd.f32 0.0, %v908
      %910 = vdwg.mxu0
      %911 = vmatprep.subr.mxu0 %v800
      %912 = vmatpush1.msra.mxu0 %v799
      %913 = vmatprep.subr.mxu0 0.0
      %914 = vmatpush1.msra.mxu0 0.0
      %915 = vmatprep.subr.mxu0 0.0
      %916 = vmatpush1.msra.mxu0 0.0
      %917 = vmatprep.subr.mxu0 0.0
      %918 = vmatpush1.msra.mxu0 0.0
      %919 = vmatprep.subr.mxu0 0.0
      %920 = vmatpush1.msra.mxu0 0.0
      %921 = vmatprep.subr.mxu0 0.0
      %922 = vmatpush1.msra.mxu0 0.0
      %923 = vmatprep.subr.mxu0 0.0
      %924 = vmatpush1.msra.mxu0 0.0
      %925 = vmatprep.subr.mxu0 0.0
      %926 = vmatpush1.msra.mxu0 0.0
      %927 = vmatprep.subr.mxu0 0.0
      %928 = vmatpush1.msra.mxu0 0.0
      %929 = vmatprep.subr.mxu0 0.0
      %930 = vmatpush1.msra.mxu0 0.0
      %931 = vmatprep.subr.mxu0 0.0
      %932 = vmatpush1.msra.mxu0 0.0
      %933 = vmatprep.subr.mxu0 0.0
      %934 = vmatpush1.msra.mxu0 0.0
      %935 = vmatprep.subr.mxu0 0.0
      %936 = vmatpush1.msra.mxu0 0.0
      %937 = vmatprep.subr.mxu0 0.0
      %938 = vmatpush1.msra.mxu0 0.0
      %939 = vmatprep.subr.mxu0 0.0
      %940 = vmatpush1.msra.mxu0 0.0
      %941 = vmatprep.subr.mxu0 0.0
      %942 = vmatpush1.msra.mxu0 0.0
      %943 = vmatprep.subr.mxu0 0.0
      %944 = vmatpush1.msra.mxu0 0.0
      %945 = vmatprep.subr.mxu0 0.0
      %946 = vmatpush1.msra.mxu0 0.0
      %947 = vmatprep.subr.mxu0 0.0
      %948 = vmatpush1.msra.mxu0 0.0
      %949 = vmatprep.subr.mxu0 0.0
      %950 = vmatpush1.msra.mxu0 0.0
      %951 = vmatprep.subr.mxu0 0.0
      %952 = vmatpush1.msra.mxu0 0.0
      %953 = vmatprep.subr.mxu0 0.0
      %954 = vmatpush1.msra.mxu0 0.0
      %955 = vmatprep.subr.mxu0 0.0
      %956 = vmatpush1.msra.mxu0 0.0
      %957 = vmatprep.subr.mxu0 0.0
      %958 = vmatpush1.msra.mxu0 0.0
      %959 = vmatprep.subr.mxu0 0.0
      %960 = vmatpush1.msra.mxu0 0.0
      %961 = vmatprep.subr.mxu0 0.0
      %962 = vmatpush1.msra.mxu0 0.0
      %963 = vmatprep.subr.mxu0 0.0
      %964 = vmatpush1.msra.mxu0 0.0
      %965 = vmatprep.subr.mxu0 0.0
      %966 = vmatpush1.msra.mxu0 0.0
      %967 = vmatprep.subr.mxu0 0.0
      %968 = vmatpush1.msra.mxu0 0.0
      %969 = vmatprep.subr.mxu0 0.0
      %970 = vmatpush1.msra.mxu0 0.0
      %971 = vmatprep.subr.mxu0 0.0
      %972 = vmatpush1.msra.mxu0 0.0
      %973 = vmatprep.subr.mxu0 0.0
      %974 = vmatpush1.msra.mxu0 0.0
      %975 = vmatprep.mubr.f32.mxu0 0.0
      %976 = vmatmul.mubr.f32.gmra.mrb[0].mxu0 %v838
      %v977 = vpop.f32.mrb[0].mxu0
      %v978 = vadd.f32 0.0, %v977
      %v979 = vpop.f32.mrb[0].mxu0
      %v980 = vadd.f32 0.0, %v979
      %981 = vdwg.mxu0
      %982 = vmatprep.subr.mxu0 %v802
      %983 = vmatpush1.msra.mxu0 %v801
      %984 = vmatprep.subr.mxu0 0.0
      %985 = vmatpush1.msra.mxu0 0.0
      %986 = vmatprep.subr.mxu0 0.0
      %987 = vmatpush1.msra.mxu0 0.0
      %988 = vmatprep.subr.mxu0 0.0
      %989 = vmatpush1.msra.mxu0 0.0
      %990 = vmatprep.subr.mxu0 0.0
      %991 = vmatpush1.msra.mxu0 0.0
      %992 = vmatprep.subr.mxu0 0.0
      %993 = vmatpush1.msra.mxu0 0.0
      %994 = vmatprep.subr.mxu0 0.0
      %995 = vmatpush1.msra.mxu0 0.0
      %996 = vmatprep.subr.mxu0 0.0
      %997 = vmatpush1.msra.mxu0 0.0
      %998 = vmatprep.subr.mxu0 0.0
      %999 = vmatpush1.msra.mxu0 0.0
      %1000 = vmatprep.subr.mxu0 0.0
      %1001 = vmatpush1.msra.mxu0 0.0
      %1002 = vmatprep.subr.mxu0 0.0
      %1003 = vmatpush1.msra.mxu0 0.0
      %1004 = vmatprep.subr.mxu0 0.0
      %1005 = vmatpush1.msra.mxu0 0.0
      %1006 = vmatprep.subr.mxu0 0.0
      %1007 = vmatpush1.msra.mxu0 0.0
      %1008 = vmatprep.subr.mxu0 0.0
      %1009 = vmatpush1.msra.mxu0 0.0
      %1010 = vmatprep.subr.mxu0 0.0
      %1011 = vmatpush1.msra.mxu0 0.0
      %1012 = vmatprep.subr.mxu0 0.0
      %1013 = vmatpush1.msra.mxu0 0.0
      %1014 = vmatprep.subr.mxu0 0.0
      %1015 = vmatpush1.msra.mxu0 0.0
      %1016 = vmatprep.subr.mxu0 0.0
      %1017 = vmatpush1.msra.mxu0 0.0
      %1018 = vmatprep.subr.mxu0 0.0
      %1019 = vmatpush1.msra.mxu0 0.0
      %1020 = vmatprep.subr.mxu0 0.0
      %1021 = vmatpush1.msra.mxu0 0.0
      %1022 = vmatprep.subr.mxu0 0.0
      %1023 = vmatpush1.msra.mxu0 0.0
      %1024 = vmatprep.subr.mxu0 0.0
      %1025 = vmatpush1.msra.mxu0 0.0
      %1026 = vmatprep.subr.mxu0 0.0
      %1027 = vmatpush1.msra.mxu0 0.0
      %1028 = vmatprep.subr.mxu0 0.0
      %1029 = vmatpush1.msra.mxu0 0.0
      %1030 = vmatprep.subr.mxu0 0.0
      %1031 = vmatpush1.msra.mxu0 0.0
      %1032 = vmatprep.subr.mxu0 0.0
      %1033 = vmatpush1.msra.mxu0 0.0
      %1034 = vmatprep.subr.mxu0 0.0
      %1035 = vmatpush1.msra.mxu0 0.0
      %1036 = vmatprep.subr.mxu0 0.0
      %1037 = vmatpush1.msra.mxu0 0.0
      %1038 = vmatprep.subr.mxu0 0.0
      %1039 = vmatpush1.msra.mxu0 0.0
      %1040 = vmatprep.subr.mxu0 0.0
      %1041 = vmatpush1.msra.mxu0 0.0
      %1042 = vmatprep.subr.mxu0 0.0
      %1043 = vmatpush1.msra.mxu0 0.0
      %1044 = vmatprep.subr.mxu0 0.0
      %1045 = vmatpush1.msra.mxu0 0.0
      %1046 = vmatprep.mubr.f32.mxu0 0.0
      %1047 = vmatmul.mubr.f32.gmra.mrb[0].mxu0 %v838
      %v1048 = vpop.f32.mrb[0].mxu0
      %v1049 = vadd.f32 0.0, %v1048
      %v1050 = vpop.f32.mrb[0].mxu0
      %v1051 = vadd.f32 0.0, %v1050
      %1052 = vdwg.mxu0
      %1053 = vmatprep.subr.mxu0 %v804
      %1054 = vmatpush1.msra.mxu0 %v803
      %1055 = vmatprep.subr.mxu0 0.0
      %1056 = vmatpush1.msra.mxu0 0.0
      %1057 = vmatprep.subr.mxu0 0.0
      %1058 = vmatpush1.msra.mxu0 0.0
      %1059 = vmatprep.subr.mxu0 0.0
      %1060 = vmatpush1.msra.mxu0 0.0
      %1061 = vmatprep.subr.mxu0 0.0
      %1062 = vmatpush1.msra.mxu0 0.0
      %1063 = vmatprep.subr.mxu0 0.0
      %1064 = vmatpush1.msra.mxu0 0.0
      %1065 = vmatprep.subr.mxu0 0.0
      %1066 = vmatpush1.msra.mxu0 0.0
      %1067 = vmatprep.subr.mxu0 0.0
      %1068 = vmatpush1.msra.mxu0 0.0
      %1069 = vmatprep.subr.mxu0 0.0
      %1070 = vmatpush1.msra.mxu0 0.0
      %1071 = vmatprep.subr.mxu0 0.0
      %1072 = vmatpush1.msra.mxu0 0.0
      %1073 = vmatprep.subr.mxu0 0.0
      %1074 = vmatpush1.msra.mxu0 0.0
      %1075 = vmatprep.subr.mxu0 0.0
      %1076 = vmatpush1.msra.mxu0 0.0
      %1077 = vmatprep.subr.mxu0 0.0
      %1078 = vmatpush1.msra.mxu0 0.0
      %1079 = vmatprep.subr.mxu0 0.0
      %1080 = vmatpush1.msra.mxu0 0.0
      %1081 = vmatprep.subr.mxu0 0.0
      %1082 = vmatpush1.msra.mxu0 0.0
      %1083 = vmatprep.subr.mxu0 0.0
      %1084 = vmatpush1.msra.mxu0 0.0
      %1085 = vmatprep.subr.mxu0 0.0
      %1086 = vmatpush1.msra.mxu0 0.0
      %1087 = vmatprep.subr.mxu0 0.0
      %1088 = vmatpush1.msra.mxu0 0.0
      %1089 = vmatprep.subr.mxu0 0.0
      %1090 = vmatpush1.msra.mxu0 0.0
      %1091 = vmatprep.subr.mxu0 0.0
      %1092 = vmatpush1.msra.mxu0 0.0
      %1093 = vmatprep.subr.mxu0 0.0
      %1094 = vmatpush1.msra.mxu0 0.0
      %1095 = vmatprep.subr.mxu0 0.0
      %1096 = vmatpush1.msra.mxu0 0.0
      %1097 = vmatprep.subr.mxu0 0.0
      %1098 = vmatpush1.msra.mxu0 0.0
      %1099 = vmatprep.subr.mxu0 0.0
      %1100 = vmatpush1.msra.mxu0 0.0
      %1101 = vmatprep.subr.mxu0 0.0
      %1102 = vmatpush1.msra.mxu0 0.0
      %1103 = vmatprep.subr.mxu0 0.0
      %1104 = vmatpush1.msra.mxu0 0.0
      %1105 = vmatprep.subr.mxu0 0.0
      %1106 = vmatpush1.msra.mxu0 0.0
      %1107 = vmatprep.subr.mxu0 0.0
      %1108 = vmatpush1.msra.mxu0 0.0
      %1109 = vmatprep.subr.mxu0 0.0
      %1110 = vmatpush1.msra.mxu0 0.0
      %1111 = vmatprep.subr.mxu0 0.0
      %1112 = vmatpush1.msra.mxu0 0.0
      %1113 = vmatprep.subr.mxu0 0.0
      %1114 = vmatpush1.msra.mxu0 0.0
      %1115 = vmatprep.subr.mxu0 0.0
      %1116 = vmatpush1.msra.mxu0 0.0
      %1117 = vmatprep.mubr.f32.mxu0 0.0
      %1118 = vmatmul.mubr.f32.gmra.mrb[0].mxu0 %v838
      %v1119 = vpop.f32.mrb[0].mxu0
      %v1120 = vadd.f32 0.0, %v1119
      %v1121 = vpop.f32.mrb[0].mxu0
      %v1122 = vadd.f32 0.0, %v1121
      %1123 = vdwg.mxu0
      %v1124 = vld [vmem:[#allocation8] sm:$0xff]
      %v1125 = vld [vmem:[#allocation8 + $0x8] sm:$0xff]
      %v1126 = vld [vmem:[#allocation8 + $0x10] sm:$0xff]
      %v1127 = vld [vmem:[#allocation8 + $0x18] sm:$0xff]
      %v1128 = vld [vmem:[#allocation8 + $0x20] sm:$0xff]
      %v1129 = vld [vmem:[#allocation8 + $0x28] sm:$0xff]
      %v1130 = vld [vmem:[#allocation8 + $0x30] sm:$0xff]
      %v1131 = vld [vmem:[#allocation8 + $0x38] sm:$0xff]
      %v1132 = vsub.f32 %v1124, %v907
      %v1133 = vsub.f32 %v1125, %v909
      %v1134 = vsub.f32 %v1126, %v978
      %v1135 = vsub.f32 %v1127, %v980
      %v1136 = vsub.f32 %v1128, %v1049
      %v1137 = vsub.f32 %v1129, %v1051
      %v1138 = vsub.f32 %v1130, %v1120
      %v1139 = vsub.f32 %v1131, %v1122
      %1140 = vst [vmem:[#allocation12] sm:$0xff] %v1132
      %1141 = vst [vmem:[#allocation12 + $0x8] sm:$0xff] %v1133
      %1142 = vst [vmem:[#allocation12 + $0x10] sm:$0xff] %v1134
      %1143 = vst [vmem:[#allocation12 + $0x18] sm:$0xff] %v1135
      %1144 = vst [vmem:[#allocation12 + $0x20] sm:$0xff] %v1136
      %1145 = vst [vmem:[#allocation12 + $0x28] sm:$0xff] %v1137
      %1146 = vst [vmem:[#allocation12 + $0x30] sm:$0xff] %v1138
      %1147 = vst [vmem:[#allocation12 + $0x38] sm:$0xff] %v1139
    $region33: #{tpu_custom_call.1} parent=1 // pred_fallthru
      _
    // Predicated region
    $region34: #{tpu_custom_call.1} parent=1 // pred_check
      _
    $region35: #{tpu_custom_call.1} parent=1 // pred_check_branch
      %1149 = sbr.rel (0) target = $region37
    $region36: #{tpu_custom_call.1} parent=1 // pred_region
      %s1151 = ssub.s32 128, 128
      %1152 = vsyncadd [#allocation7], %s1151
      %s1154 = sshll.u32 [#allocation11], 4
      %s1155 = int_to_ptr.vmem [resolvable:$true] %s1154
      %1157 = dma.vmem_to_hbm [thread:$0]  %s1155, 128, %s3, [#allocation7]
    $region37: #{tpu_custom_call.1} parent=1 // pred_fallthru
      _
    // Predicated region
    $region38: #{tpu_custom_call.1} parent=1 // pred_check
      _
    $region39: #{tpu_custom_call.1} parent=1 // pred_check_branch
      %1159 = sbr.rel (0) target = $region41
    $region40: #{tpu_custom_call.1} parent=1 // pred_region
      %s1161 = ssub.s32 1024, 1024
      %1162 = vsyncadd [#allocation13], %s1161
      %s1164 = sshll.u32 [#allocation12], 4
      %s1165 = int_to_ptr.vmem [resolvable:$true] %s1164
      %1167 = dma.vmem_to_hbm [thread:$0]  %s1165, 1024, %s4, [#allocation13]
    $region41: #{tpu_custom_call.1} parent=1 // pred_fallthru
      _
    // Predicated region
    $region42: #{tpu_custom_call.1} parent=1 // pred_check
      _
    $region43: #{tpu_custom_call.1} parent=1 // pred_check_branch
      %1169 = sbr.rel (0) target = $region45
    $region44: #{tpu_custom_call.1} parent=1 // pred_region
      %s1171 = ssub.s32 16, 16
      %1172 = vsyncadd [#allocation13], %s1171
      %s1174 = sshll.u32 [#allocation14], 4
      %s1175 = int_to_ptr.vmem [resolvable:$true] %s1174
      %1177 = dma.vmem_to_hbm [thread:$0]  %s1175, 16, %s5, [#allocation13]
    $region45: #{tpu_custom_call.1} parent=1 // pred_fallthru
      _
    // Predicated region
    $region46: #{tpu_custom_call.1} parent=1 // pred_check
      _
    $region47: #{tpu_custom_call.1} parent=1 // pred_check_branch
      %1179 = sbr.rel (0) target = $region49
    $region48: #{tpu_custom_call.1} parent=1 // pred_region
      %1180 = dma.done [#allocation7], 128
    $region49: #{tpu_custom_call.1} parent=1 // pred_fallthru
      _
    // Predicated region
    $region50: #{tpu_custom_call.1} parent=1 // pred_check
      _
    $region51: #{tpu_custom_call.1} parent=1 // pred_check_branch
      %1182 = sbr.rel (0) target = $region53
    $region52: #{tpu_custom_call.1} parent=1 // pred_region
      %1183 = dma.done [#allocation13], 1024
    $region53: #{tpu_custom_call.1} parent=1 // pred_fallthru
      _
    // Predicated region
    $region54: #{tpu_custom_call.1} parent=1 // pred_check
      _
    $region55: #{tpu_custom_call.1} parent=1 // pred_check_branch
      %1185 = sbr.rel (0) target = $region57
    $region56: #{tpu_custom_call.1} parent=1 // pred_region
      %1186 = dma.done [#allocation13], 16
    $region57: #{tpu_custom_call.1} parent=1 // pred_fallthru
      _
    %1187 = vsyncpa [#allocation6], 1
    %1188 = vsyncpa [#allocation9], 1
    %1189 = vsyncpa [#allocation7], 1
    %1190 = vsyncpa [#allocation13], 1

</llo_original>
